<compile_context>
chip_gen: v7x
topology: tpu7x:2x2x1
jax: 0.10.0
libtpu: 0.0.40
codegen_flags: <defaults>
</compile_context>

<pallas_src>
import jax
import jax.numpy as jnp
from jax import lax
from jax.experimental import pallas as pl
from jax.experimental.pallas import tpu as pltpu

# ----------------------------- configuration -------------------------------
B = 2                          # batch
C_IN = 3                       # image channels
IMG = 16                       # image resolution (small synthetic)
PATCH = 4                      # patch size for the synthetic backbone
GRID = IMG // PATCH            # 4
P = GRID * GRID                # 16 spatial tokens (stand-in for 49)
PATCH_DIM = C_IN * PATCH * PATCH   # 48
FEAT_DIM = 64                  # stand-in for feature_dim (2048 / 384 / ...)
DEC_DIM = 64                   # args.decoder_dim
NQ = 8                         # args.queries (query 0: R hand, 1: L hand, 2: object)
FFN = 128                      # decoder MLP hidden dim

OUT_R = 16 * 9 + 10 + 3        # pose rotmats (16x3x3) + shape (10) + root (3) = 157
OUT_O = 3 + 1 + 3              # rotation (3) + angle (1) + root (3) = 7
HEAD_DIM = 2 * OUT_R + OUT_O   # 321
HEAD_PAD = 384                 # padded to a multiple of 128 (lane-dense store)
FVEC_PAD = 128                 # feat_vec lane padding

INV_SQRT_D = 1.0 / float(DEC_DIM) ** 0.5


# ------------------------------- fused kernel --------------------------------
def fused_kernel(x_ref, wp_ref, bp_ref,
                 wproj_ref, pos_ref, q_ref, wq_ref, wkv_ref, wo_ref,
                 w1_ref, b1_ref, w2_ref, b2_ref, wh_ref,
                 fvec_ref, head_ref):
    f32 = jnp.float32
    bf16 = jnp.bfloat16

    # ---- backbone: patch embedding + ReLU, whole batch in one matmul ----
    # x_ref: (B*P, PATCH_DIM) bf16, wp_ref: (PATCH_DIM, FEAT_DIM) bf16
    f = jnp.dot(x_ref[...], wp_ref[...], preferred_element_type=f32) + bp_ref[...]
    f = jnp.maximum(f, 0.0)                                   # (B*P, FEAT_DIM) f32

    # feat_vec = features.view(B, C, -1).mean(2) -> mean over spatial tokens
    fvec_rows = [jnp.mean(f[b * P:(b + 1) * P], axis=0, keepdims=True)
                 for b in range(B)]                           # static, B=2
    fvec = jnp.concatenate(fvec_rows, axis=0)                 # (B, FEAT_DIM)
    fvec_ref[...] = jnp.concatenate(
        [fvec, jnp.zeros((B, FVEC_PAD - FEAT_DIM), f32)], axis=-1)

    # ---- HandTransformer decoder block (cross-attention + FFN) ----
    mem = jnp.dot(f.astype(bf16), wproj_ref[...],
                  preferred_element_type=f32) + pos_ref[...]  # (B*P, D) f32
    kv = jnp.dot(mem.astype(bf16), wkv_ref[...],
                 preferred_element_type=f32)                  # (B*P, 2D) f32

    q_raw = q_ref[...]                                        # (NQ, D) f32
    # 1/sqrt(d) is folded into wq by the host-side prepare step
    q = jnp.dot(q_raw.astype(bf16), wq_ref[...], preferred_element_type=f32)
    q_bf = q.astype(bf16)

    attn_rows = []
    for b in range(B):                                        # B=2, unrolled
        k_b = kv[b * P:(b + 1) * P, :DEC_DIM].astype(bf16)    # (P, D)
        v_b = kv[b * P:(b + 1) * P, DEC_DIM:].astype(bf16)    # (P, D)
        # contract last dims directly -> no explicit transpose of k
        s = lax.dot_general(q_bf, k_b, (((1,), (1,)), ((), ())),
                            preferred_element_type=f32)       # (NQ, P) f32
        s = s - jnp.max(s, axis=-1, keepdims=True)
        p = jnp.exp(s)
        p = p * pl.reciprocal(jnp.sum(p, axis=-1, keepdims=True), approx=True)
        attn_rows.append(jnp.dot(p.astype(bf16), v_b,
                                 preferred_element_type=f32)) # (NQ, D)
    attn = jnp.concatenate(attn_rows, axis=0)                 # (B*NQ, D) f32

    q_tiled = jnp.concatenate([q_raw] * B, axis=0)            # (B*NQ, D)
    h = q_tiled + jnp.dot(attn.astype(bf16), wo_ref[...],
                          preferred_element_type=f32)         # residual
    # TODO(synk): LayerNorm omitted (pre/post-norm choice is config-dependent).
    ffn_h = jnp.maximum(
        jnp.dot(h.astype(bf16), w1_ref[...], preferred_element_type=f32)
        + b1_ref[...], 0.0)
    ffn = jnp.dot(ffn_h.astype(bf16), w2_ref[...],
                  preferred_element_type=f32) + b2_ref[...]
    dec = h + ffn                                             # (B*NQ, D) f32

    # ---- parameter heads: one lane-dense (B*NQ, 64) @ (64, 384) matmul ----
    head_ref[...] = jnp.dot(dec.astype(bf16), wh_ref[...],
                            preferred_element_type=f32)       # (B*NQ, 384)


# ------------------------------ pallas wrapper --------------------------------
def _full(shape):
    return pl.BlockSpec(shape, lambda i, _n=len(shape): (0,) * _n)


def run_fused(x_bf, kp):
    return pl.pallas_call(
        fused_kernel,
        out_shape=(jax.ShapeDtypeStruct((B, FVEC_PAD), jnp.float32),
                   jax.ShapeDtypeStruct((B * NQ, HEAD_PAD), jnp.float32)),
        grid=(1,),
        in_specs=[_full((B * P, PATCH_DIM)),        # patches (bf16)
                  _full((PATCH_DIM, FEAT_DIM)),     # w_patch
                  _full((1, FEAT_DIM)),             # b_patch
                  _full((FEAT_DIM, DEC_DIM)),       # w_proj
                  _full((B * P, DEC_DIM)),          # pos enc (tiled over batch)
                  _full((NQ, DEC_DIM)),             # learned queries (f32)
                  _full((DEC_DIM, DEC_DIM)),        # Wq (pre-scaled)
                  _full((DEC_DIM, 2 * DEC_DIM)),    # Wk|Wv fused
                  _full((DEC_DIM, DEC_DIM)),        # Wo
                  _full((DEC_DIM, FFN)),            # W1
                  _full((1, FFN)),                  # b1
                  _full((FFN, DEC_DIM)),            # W2
                  _full((1, DEC_DIM)),              # b2
                  _full((DEC_DIM, HEAD_PAD))],      # fused head weights
        out_specs=(_full((B, FVEC_PAD)),
                   _full((B * NQ, HEAD_PAD))),
        compiler_params=pltpu.CompilerParams(dimension_semantics=("arbitrary",)),
    )(x_bf, kp["w_patch"], kp["b_patch"], kp["w_proj"], kp["pos_tiled"],
      kp["queries"], kp["wq"], kp["wkv"], kp["wo"],
      kp["w1"], kp["b1"], kp["w2"], kp["b2"], kp["w_heads"])


# ------------------------------ glue (plain JAX) -----------------------------
def patchify(images):
    # images: (B, C, H, W) NCHW -> (B*P, C*PATCH*PATCH)
    b, c, h, w = images.shape
    x = images.reshape(b, c, GRID, PATCH, GRID, PATCH)
    x = jnp.transpose(x, (0, 2, 4, 1, 3, 5))
    return x.reshape(b * GRID * GRID, c * PATCH * PATCH)


def init_params(key):
    ks = jax.random.split(key, 16)
    s = 0.02
    return {
        "w_patch": jax.random.normal(ks[0], (PATCH_DIM, FEAT_DIM), jnp.float32) * s,
        "b_patch": jnp.zeros((1, FEAT_DIM), jnp.float32),
        "w_proj": jax.random.normal(ks[1], (FEAT_DIM, DEC_DIM), jnp.float32) * s,
        "pos_enc": jax.random.normal(ks[2], (P, DEC_DIM), jnp.float32) * s,
        "queries": jax.random.normal(ks[3], (NQ, DEC_DIM), jnp.float32) * s,
        "wq": jax.random.normal(ks[4], (DEC_DIM, DEC_DIM), jnp.float32) * s,
        "wk": jax.random.normal(ks[5], (DEC_DIM, DEC_DIM), jnp.float32) * s,
        "wv": jax.random.normal(ks[6], (DEC_DIM, DEC_DIM), jnp.float32) * s,
        "wo": jax.random.normal(ks[7], (DEC_DIM, DEC_DIM), jnp.float32) * s,
        "w1": jax.random.normal(ks[8], (DEC_DIM, FFN), jnp.float32) * s,
        "b1": jnp.zeros((1, FFN), jnp.float32),
        "w2": jax.random.normal(ks[9], (FFN, DEC_DIM), jnp.float32) * s,
        "b2": jnp.zeros((1, DEC_DIM), jnp.float32),
        "w_head_r": jax.random.normal(ks[10], (DEC_DIM, OUT_R), jnp.float32) * s,
        "w_head_l": jax.random.normal(ks[11], (DEC_DIM, OUT_R), jnp.float32) * s,
        "w_head_o": jax.random.normal(ks[12], (DEC_DIM, OUT_O), jnp.float32) * s,
    }


def prepare_params(p):
    """One-time host-side prep: bf16 MXU weights, fused Wk|Wv, fused+padded heads,
    1/sqrt(d) folded into Wq, pos-enc tiled over the batch."""
    bf16 = jnp.bfloat16
    w_heads = jnp.concatenate(
        [p["w_head_r"], p["w_head_l"], p["w_head_o"],
         jnp.zeros((DEC_DIM, HEAD_PAD - HEAD_DIM), jnp.float32)], axis=1)
    return {
        "w_patch": p["w_patch"].astype(bf16),
        "b_patch": p["b_patch"],
        "w_proj": p["w_proj"].astype(bf16),
        "pos_tiled": jnp.tile(p["pos_enc"], (B, 1)),
        "queries": p["queries"],
        "wq": (p["wq"] * INV_SQRT_D).astype(bf16),
        "wkv": jnp.concatenate([p["wk"], p["wv"]], axis=1).astype(bf16),
        "wo": p["wo"].astype(bf16),
        "w1": p["w1"].astype(bf16),
        "b1": p["b1"],
        "w2": p["w2"].astype(bf16),
        "b2": p["b2"],
        "w_heads": w_heads.astype(bf16),
    }


@jax.jit
def transformer_sf_forward(images, K, kparams):
    # images: (B, 3, 16, 16) NCHW float32; K: (B, 3, 3) intrinsics (consumed
    # only by MANO/Arti projection heads -> TODO(synk) below).
    del K
    x = patchify(images).astype(jnp.bfloat16)                    # (B*P, PATCH_DIM)

    fvec_pad, head_out = run_fused(x, kparams)

    feat_vec = fvec_pad[:, :FEAT_DIM]                            # (B, FEAT_DIM)
    head3 = head_out.reshape(B, NQ, HEAD_PAD)
    out_r = head3[:, 0, :OUT_R]                                  # query 0 -> R hand
    out_l = head3[:, 1, OUT_R:2 * OUT_R]                         # query 1 -> L hand
    out_o = head3[:, 2, 2 * OUT_R:2 * OUT_R + OUT_O]             # query 2 -> object

    def split_hand(o):
        return {
            "pose": o[:, :144].reshape(B, 16, 3, 3),   # rotmats (raw, see TODO)
            "shape": o[:, 144:154],
            "root": o[:, 154:157],
        }

    mano_params_r = split_hand(out_r)
    mano_params_l = split_hand(out_l)
    arti_params = {
        "rotation": out_o[:, 0:3],
        "angle": out_o[:, 3:4],
        "root": out_o[:, 4:7],
    }

    # TODO(synk): MANOHead / ArtiHead (MANO mesh regression, weak-perspective
    # projection with K) need external MANO assets; outputs here are the raw
    # regressed parameters, prefixed like the original xdict merge.
    output = {}
    output.update({f"mano.r.{k}": v for k, v in mano_params_r.items()})
    output.update({f"mano.l.{k}": v for k, v in mano_params_l.items()})
    output.update({f"object.{k}": v for k, v in arti_params.items()})
    output["feat_vec"] = feat_vec
    return output


if __name__ == "__main__":
    key = jax.random.PRNGKey(0)
    k_img, k_K, k_par = jax.random.split(key, 3)

    images = jax.random.normal(k_img, (B, C_IN, IMG, IMG), jnp.float32)  # NCHW
    K = jnp.tile(jnp.eye(3, dtype=jnp.float32)[None], (B, 1, 1))         # intrinsics
    params = init_params(k_par)
    kparams = jax.tree_util.tree_map(lambda a: a, prepare_params(params))

    out = transformer_sf_forward(images, K, kparams)
    jax.block_until_ready(out)

    # sanity checks on shapes
    assert out["feat_vec"].shape == (B, FEAT_DIM)
    assert out["mano.r.pose"].shape == (B, 16, 3, 3)
    assert out["mano.l.shape"].shape == (B, 10)
    assert out["object.angle"].shape == (B, 1)
    print("KERNEL_OK")
</pallas_src>

<mosaic_0001>
module attributes {stable_mosaic.version = 11 : i64} {
  func.func @fused_kernel(%arg0: i32, %arg1: memref<32x48xbf16, #tpu.memory_space<vmem>>, %arg2: memref<48x64xbf16, #tpu.memory_space<vmem>>, %arg3: memref<1x64xf32, #tpu.memory_space<vmem>>, %arg4: memref<64x64xbf16, #tpu.memory_space<vmem>>, %arg5: memref<32x64xf32, #tpu.memory_space<vmem>>, %arg6: memref<8x64xf32, #tpu.memory_space<vmem>>, %arg7: memref<64x64xbf16, #tpu.memory_space<vmem>>, %arg8: memref<64x128xbf16, #tpu.memory_space<vmem>>, %arg9: memref<64x64xbf16, #tpu.memory_space<vmem>>, %arg10: memref<64x128xbf16, #tpu.memory_space<vmem>>, %arg11: memref<1x128xf32, #tpu.memory_space<vmem>>, %arg12: memref<128x64xbf16, #tpu.memory_space<vmem>>, %arg13: memref<1x64xf32, #tpu.memory_space<vmem>>, %arg14: memref<64x384xbf16, #tpu.memory_space<vmem>>, %arg15: memref<2x128xf32, #tpu.memory_space<vmem>>, %arg16: memref<16x384xf32, #tpu.memory_space<vmem>>) attributes {dimension_semantics = [#tpu.dimension_semantics<arbitrary>], iteration_bounds = array<i64: 1>, scalar_prefetch = 0 : i64, scratch_operands = 0 : i64, tpu.core_type = #tpu.core_type<tc>, window_params = [{pipeline_mode = #tpu.pipeline_mode<synchronous>, transform_indices = @transform_0, window_bounds = array<i64: 32, 48>}, {pipeline_mode = #tpu.pipeline_mode<synchronous>, transform_indices = @transform_1, window_bounds = array<i64: 48, 64>}, {pipeline_mode = #tpu.pipeline_mode<synchronous>, transform_indices = @transform_2, window_bounds = array<i64: 1, 64>}, {pipeline_mode = #tpu.pipeline_mode<synchronous>, transform_indices = @transform_3, window_bounds = array<i64: 64, 64>}, {pipeline_mode = #tpu.pipeline_mode<synchronous>, transform_indices = @transform_4, window_bounds = array<i64: 32, 64>}, {pipeline_mode = #tpu.pipeline_mode<synchronous>, transform_indices = @transform_5, window_bounds = array<i64: 8, 64>}, {pipeline_mode = #tpu.pipeline_mode<synchronous>, transform_indices = @transform_6, window_bounds = array<i64: 64, 64>}, {pipeline_mode = #tpu.pipeline_mode<synchronous>, transform_indices = @transform_7, window_bounds = array<i64: 64, 128>}, {pipeline_mode = #tpu.pipeline_mode<synchronous>, transform_indices = @transform_8, window_bounds = array<i64: 64, 64>}, {pipeline_mode = #tpu.pipeline_mode<synchronous>, transform_indices = @transform_9, window_bounds = array<i64: 64, 128>}, {pipeline_mode = #tpu.pipeline_mode<synchronous>, transform_indices = @transform_10, window_bounds = array<i64: 1, 128>}, {pipeline_mode = #tpu.pipeline_mode<synchronous>, transform_indices = @transform_11, window_bounds = array<i64: 128, 64>}, {pipeline_mode = #tpu.pipeline_mode<synchronous>, transform_indices = @transform_12, window_bounds = array<i64: 1, 64>}, {pipeline_mode = #tpu.pipeline_mode<synchronous>, transform_indices = @transform_13, window_bounds = array<i64: 64, 384>}, {pipeline_mode = #tpu.pipeline_mode<synchronous>, transform_indices = @transform_14, window_bounds = array<i64: 2, 128>}, {pipeline_mode = #tpu.pipeline_mode<synchronous>, transform_indices = @transform_15, window_bounds = array<i64: 16, 384>}]} {
    %c0 = arith.constant 0 : index
    %c0_0 = arith.constant 0 : index
    %0 = vector.load %arg1[%c0, %c0_0] : memref<32x48xbf16, #tpu.memory_space<vmem>>, vector<32x48xbf16>
    %c0_1 = arith.constant 0 : index
    %c0_2 = arith.constant 0 : index
    %1 = vector.load %arg2[%c0_1, %c0_2] : memref<48x64xbf16, #tpu.memory_space<vmem>>, vector<48x64xbf16>
    %cst = arith.constant dense<0.000000e+00> : vector<32x64xf32>
    %2 = tpu.matmul %0, %1, %cst {dimension_numbers = #tpu.dot_dimension_numbers<[1], [0], [0], [1], [0, 0, 1, 1], [], []>} : vector<32x48xbf16>, vector<48x64xbf16>, vector<32x64xf32> -> vector<32x64xf32>
    %c0_3 = arith.constant 0 : index
    %c0_4 = arith.constant 0 : index
    %3 = vector.load %arg3[%c0_3, %c0_4] : memref<1x64xf32, #tpu.memory_space<vmem>>, vector<1x64xf32>
    %4 = vector.broadcast %3 : vector<1x64xf32> to vector<32x64xf32>
    %5 = arith.addf %2, %4 : vector<32x64xf32>
    %cst_5 = arith.constant 0.000000e+00 : f32
    %6 = vector.broadcast %cst_5 : f32 to vector<32x64xf32>
    %7 = arith.maximumf %5, %6 : vector<32x64xf32>
    %8 = vector.extract_strided_slice %7 {offsets = [0, 0], sizes = [16, 64], strides = [1, 1]} : vector<32x64xf32> to vector<16x64xf32>
    %cst_6 = arith.constant dense<0.000000e+00> : vector<64xf32>
    %9 = vector.multi_reduction <add>, %8, %cst_6 [0] : vector<16x64xf32> to vector<64xf32>
    %10 = vector.shape_cast %9 : vector<64xf32> to vector<1x64xf32>
    %cst_7 = arith.constant 1.600000e+01 : f32
    %11 = vector.broadcast %cst_7 : f32 to vector<1x64xf32>
    %12 = arith.divf %10, %11 : vector<1x64xf32>
    %13 = vector.extract_strided_slice %7 {offsets = [16, 0], sizes = [16, 64], strides = [1, 1]} : vector<32x64xf32> to vector<16x64xf32>
    %cst_8 = arith.constant dense<0.000000e+00> : vector<64xf32>
    %14 = vector.multi_reduction <add>, %13, %cst_8 [0] : vector<16x64xf32> to vector<64xf32>
    %15 = vector.shape_cast %14 : vector<64xf32> to vector<1x64xf32>
    %cst_9 = arith.constant 1.600000e+01 : f32
    %16 = vector.broadcast %cst_9 : f32 to vector<1x64xf32>
    %17 = arith.divf %15, %16 : vector<1x64xf32>
    %18 = tpu.concatenate %12, %17 in 0 : vector<1x64xf32>, vector<1x64xf32> -> vector<2x64xf32>
    %cst_10 = arith.constant 0.000000e+00 : f32
    %19 = vector.broadcast %cst_10 : f32 to vector<2x64xf32>
    %20 = tpu.concatenate %18, %19 in 1 : vector<2x64xf32>, vector<2x64xf32> -> vector<2x128xf32>
    %c0_11 = arith.constant 0 : index
    %c0_12 = arith.constant 0 : index
    %21 = vector.load %arg15[%c0_11, %c0_12] : memref<2x128xf32, #tpu.memory_space<vmem>>, vector<2x128xf32>
    tpu.vector_store %arg15[%c0_11, %c0_12], %20 {strides = array<i32>} : memref<2x128xf32, #tpu.memory_space<vmem>>, vector<2x128xf32>,
    %22 = arith.truncf %7 : vector<32x64xf32> to vector<32x64xbf16>
    %c0_13 = arith.constant 0 : index
    %c0_14 = arith.constant 0 : index
    %23 = vector.load %arg4[%c0_13, %c0_14] : memref<64x64xbf16, #tpu.memory_space<vmem>>, vector<64x64xbf16>
    %cst_15 = arith.constant dense<0.000000e+00> : vector<32x64xf32>
    %24 = tpu.matmul %22, %23, %cst_15 {dimension_numbers = #tpu.dot_dimension_numbers<[1], [0], [0], [1], [0, 0, 1, 1], [], []>} : vector<32x64xbf16>, vector<64x64xbf16>, vector<32x64xf32> -> vector<32x64xf32>
    %c0_16 = arith.constant 0 : index
    %c0_17 = arith.constant 0 : index
    %25 = vector.load %arg5[%c0_16, %c0_17] : memref<32x64xf32, #tpu.memory_space<vmem>>, vector<32x64xf32>
    %26 = arith.addf %24, %25 : vector<32x64xf32>
    %27 = arith.truncf %26 : vector<32x64xf32> to vector<32x64xbf16>
    %c0_18 = arith.constant 0 : index
    %c0_19 = arith.constant 0 : index
    %28 = vector.load %arg8[%c0_18, %c0_19] : memref<64x128xbf16, #tpu.memory_space<vmem>>, vector<64x128xbf16>
    %cst_20 = arith.constant dense<0.000000e+00> : vector<32x128xf32>
    %29 = tpu.matmul %27, %28, %cst_20 {dimension_numbers = #tpu.dot_dimension_numbers<[1], [0], [0], [1], [0, 0, 1, 1], [], []>} : vector<32x64xbf16>, vector<64x128xbf16>, vector<32x128xf32> -> vector<32x128xf32>
    %c0_21 = arith.constant 0 : index
    %c0_22 = arith.constant 0 : index
    %30 = vector.load %arg6[%c0_21, %c0_22] : memref<8x64xf32, #tpu.memory_space<vmem>>, vector<8x64xf32>
    %31 = arith.truncf %30 : vector<8x64xf32> to vector<8x64xbf16>
    %c0_23 = arith.constant 0 : index
    %c0_24 = arith.constant 0 : index
    %32 = vector.load %arg7[%c0_23, %c0_24] : memref<64x64xbf16, #tpu.memory_space<vmem>>, vector<64x64xbf16>
    %cst_25 = arith.constant dense<0.000000e+00> : vector<8x64xf32>
    %33 = tpu.matmul %31, %32, %cst_25 {dimension_numbers = #tpu.dot_dimension_numbers<[1], [0], [0], [1], [0, 0, 1, 1], [], []>} : vector<8x64xbf16>, vector<64x64xbf16>, vector<8x64xf32> -> vector<8x64xf32>
    %34 = arith.truncf %33 : vector<8x64xf32> to vector<8x64xbf16>
    %35 = vector.extract_strided_slice %29 {offsets = [0, 0], sizes = [16, 64], strides = [1, 1]} : vector<32x128xf32> to vector<16x64xf32>
    %36 = arith.truncf %35 : vector<16x64xf32> to vector<16x64xbf16>
    %37 = vector.extract_strided_slice %29 {offsets = [0, 64], sizes = [16, 64], strides = [1, 1]} : vector<32x128xf32> to vector<16x64xf32>
    %38 = arith.truncf %37 : vector<16x64xf32> to vector<16x64xbf16>
    %cst_26 = arith.constant dense<0.000000e+00> : vector<8x16xf32>
    %39 = tpu.matmul %34, %36, %cst_26 {dimension_numbers = #tpu.dot_dimension_numbers<[1], [1], [0], [0], [0, 0, 1, 0], [], []>} : vector<8x64xbf16>, vector<16x64xbf16>, vector<8x16xf32> -> vector<8x16xf32>
    %cst_27 = arith.constant dense<0xFF800000> : vector<8xf32>
    %40 = vector.multi_reduction <maximumf>, %39, %cst_27 [1] : vector<8x16xf32> to vector<8xf32>
    %41 = vector.shape_cast %40 : vector<8xf32> to vector<8x1xf32>
    %42 = vector.broadcast %41 : vector<8x1xf32> to vector<8x16xf32>
    %43 = arith.subf %39, %42 : vector<8x16xf32>
    %44 = math.exp %43 : vector<8x16xf32>
    %cst_28 = arith.constant dense<0.000000e+00> : vector<8xf32>
    %45 = vector.multi_reduction <add>, %44, %cst_28 [1] : vector<8x16xf32> to vector<8xf32>
    %46 = vector.shape_cast %45 : vector<8xf32> to vector<8x1xf32>
    %47 = tpu.reciprocal %46 {approx = true} : vector<8x1xf32> -> vector<8x1xf32>
    %48 = vector.broadcast %47 : vector<8x1xf32> to vector<8x16xf32>
    %49 = arith.mulf %44, %48 : vector<8x16xf32>
    %50 = arith.truncf %49 : vector<8x16xf32> to vector<8x16xbf16>
    %cst_29 = arith.constant dense<0.000000e+00> : vector<8x64xf32>
    %51 = tpu.matmul %50, %38, %cst_29 {dimension_numbers = #tpu.dot_dimension_numbers<[1], [0], [0], [1], [0, 0, 1, 1], [], []>} : vector<8x16xbf16>, vector<16x64xbf16>, vector<8x64xf32> -> vector<8x64xf32>
    %52 = vector.extract_strided_slice %29 {offsets = [16, 0], sizes = [16, 64], strides = [1, 1]} : vector<32x128xf32> to vector<16x64xf32>
    %53 = arith.truncf %52 : vector<16x64xf32> to vector<16x64xbf16>
    %54 = vector.extract_strided_slice %29 {offsets = [16, 64], sizes = [16, 64], strides = [1, 1]} : vector<32x128xf32> to vector<16x64xf32>
    %55 = arith.truncf %54 : vector<16x64xf32> to vector<16x64xbf16>
    %cst_30 = arith.constant dense<0.000000e+00> : vector<8x16xf32>
    %56 = tpu.matmul %34, %53, %cst_30 {dimension_numbers = #tpu.dot_dimension_numbers<[1], [1], [0], [0], [0, 0, 1, 0], [], []>} : vector<8x64xbf16>, vector<16x64xbf16>, vector<8x16xf32> -> vector<8x16xf32>
    %cst_31 = arith.constant dense<0xFF800000> : vector<8xf32>
    %57 = vector.multi_reduction <maximumf>, %56, %cst_31 [1] : vector<8x16xf32> to vector<8xf32>
    %58 = vector.shape_cast %57 : vector<8xf32> to vector<8x1xf32>
    %59 = vector.broadcast %58 : vector<8x1xf32> to vector<8x16xf32>
    %60 = arith.subf %56, %59 : vector<8x16xf32>
    %61 = math.exp %60 : vector<8x16xf32>
    %cst_32 = arith.constant dense<0.000000e+00> : vector<8xf32>
    %62 = vector.multi_reduction <add>, %61, %cst_32 [1] : vector<8x16xf32> to vector<8xf32>
    %63 = vector.shape_cast %62 : vector<8xf32> to vector<8x1xf32>
    %64 = tpu.reciprocal %63 {approx = true} : vector<8x1xf32> -> vector<8x1xf32>
    %65 = vector.broadcast %64 : vector<8x1xf32> to vector<8x16xf32>
    %66 = arith.mulf %61, %65 : vector<8x16xf32>
    %67 = arith.truncf %66 : vector<8x16xf32> to vector<8x16xbf16>
    %cst_33 = arith.constant dense<0.000000e+00> : vector<8x64xf32>
    %68 = tpu.matmul %67, %55, %cst_33 {dimension_numbers = #tpu.dot_dimension_numbers<[1], [0], [0], [1], [0, 0, 1, 1], [], []>} : vector<8x16xbf16>, vector<16x64xbf16>, vector<8x64xf32> -> vector<8x64xf32>
    %69 = tpu.concatenate %51, %68 in 0 : vector<8x64xf32>, vector<8x64xf32> -> vector<16x64xf32>
    %70 = tpu.concatenate %30, %30 in 0 : vector<8x64xf32>, vector<8x64xf32> -> vector<16x64xf32>
    %71 = arith.truncf %69 : vector<16x64xf32> to vector<16x64xbf16>
    %c0_34 = arith.constant 0 : index
    %c0_35 = arith.constant 0 : index
    %72 = vector.load %arg9[%c0_34, %c0_35] : memref<64x64xbf16, #tpu.memory_space<vmem>>, vector<64x64xbf16>
    %cst_36 = arith.constant dense<0.000000e+00> : vector<16x64xf32>
    %73 = tpu.matmul %71, %72, %cst_36 {dimension_numbers = #tpu.dot_dimension_numbers<[1], [0], [0], [1], [0, 0, 1, 1], [], []>} : vector<16x64xbf16>, vector<64x64xbf16>, vector<16x64xf32> -> vector<16x64xf32>
    %74 = arith.addf %70, %73 : vector<16x64xf32>
    %75 = arith.truncf %74 : vector<16x64xf32> to vector<16x64xbf16>
    %c0_37 = arith.constant 0 : index
    %c0_38 = arith.constant 0 : index
    %76 = vector.load %arg10[%c0_37, %c0_38] : memref<64x128xbf16, #tpu.memory_space<vmem>>, vector<64x128xbf16>
    %cst_39 = arith.constant dense<0.000000e+00> : vector<16x128xf32>
    %77 = tpu.matmul %75, %76, %cst_39 {dimension_numbers = #tpu.dot_dimension_numbers<[1], [0], [0], [1], [0, 0, 1, 1], [], []>} : vector<16x64xbf16>, vector<64x128xbf16>, vector<16x128xf32> -> vector<16x128xf32>
    %c0_40 = arith.constant 0 : index
    %c0_41 = arith.constant 0 : index
    %78 = vector.load %arg11[%c0_40, %c0_41] : memref<1x128xf32, #tpu.memory_space<vmem>>, vector<1x128xf32>
    %79 = vector.broadcast %78 : vector<1x128xf32> to vector<16x128xf32>
    %80 = arith.addf %77, %79 : vector<16x128xf32>
    %cst_42 = arith.constant 0.000000e+00 : f32
    %81 = vector.broadcast %cst_42 : f32 to vector<16x128xf32>
    %82 = arith.maximumf %80, %81 : vector<16x128xf32>
    %83 = arith.truncf %82 : vector<16x128xf32> to vector<16x128xbf16>
    %c0_43 = arith.constant 0 : index
    %c0_44 = arith.constant 0 : index
    %84 = vector.load %arg12[%c0_43, %c0_44] : memref<128x64xbf16, #tpu.memory_space<vmem>>, vector<128x64xbf16>
    %cst_45 = arith.constant dense<0.000000e+00> : vector<16x64xf32>
    %85 = tpu.matmul %83, %84, %cst_45 {dimension_numbers = #tpu.dot_dimension_numbers<[1], [0], [0], [1], [0, 0, 1, 1], [], []>} : vector<16x128xbf16>, vector<128x64xbf16>, vector<16x64xf32> -> vector<16x64xf32>
    %c0_46 = arith.constant 0 : index
    %c0_47 = arith.constant 0 : index
    %86 = vector.load %arg13[%c0_46, %c0_47] : memref<1x64xf32, #tpu.memory_space<vmem>>, vector<1x64xf32>
    %87 = vector.broadcast %86 : vector<1x64xf32> to vector<16x64xf32>
    %88 = arith.addf %85, %87 : vector<16x64xf32>
    %89 = arith.addf %74, %88 : vector<16x64xf32>
    %90 = arith.truncf %89 : vector<16x64xf32> to vector<16x64xbf16>
    %c0_48 = arith.constant 0 : index
    %c0_49 = arith.constant 0 : index
    %91 = vector.load %arg14[%c0_48, %c0_49] : memref<64x384xbf16, #tpu.memory_space<vmem>>, vector<64x384xbf16>
    %cst_50 = arith.constant dense<0.000000e+00> : vector<16x384xf32>
    %92 = tpu.matmul %90, %91, %cst_50 {dimension_numbers = #tpu.dot_dimension_numbers<[1], [0], [0], [1], [0, 0, 1, 1], [], []>} : vector<16x64xbf16>, vector<64x384xbf16>, vector<16x384xf32> -> vector<16x384xf32>
    %c0_51 = arith.constant 0 : index
    %c0_52 = arith.constant 0 : index
    %93 = vector.load %arg16[%c0_51, %c0_52] : memref<16x384xf32, #tpu.memory_space<vmem>>, vector<16x384xf32>
    tpu.vector_store %arg16[%c0_51, %c0_52], %92 {strides = array<i32>} : memref<16x384xf32, #tpu.memory_space<vmem>>, vector<16x384xf32>,
    return
  }
  func.func @transform_0(%arg0: i32) -> (i32, i32) {
    %c0_i32 = arith.constant 0 : i32
    %c0_i32_0 = arith.constant 0 : i32
    %c0_i32_1 = arith.constant 0 : i32
    return %c0_i32, %c0_i32_0 : i32, i32
  }
  func.func @transform_1(%arg0: i32) -> (i32, i32) {
    %c0_i32 = arith.constant 0 : i32
    %c0_i32_0 = arith.constant 0 : i32
    %c0_i32_1 = arith.constant 0 : i32
    return %c0_i32, %c0_i32_0 : i32, i32
  }
  func.func @transform_2(%arg0: i32) -> (i32, i32) {
    %c0_i32 = arith.constant 0 : i32
    %c0_i32_0 = arith.constant 0 : i32
    %c0_i32_1 = arith.constant 0 : i32
    return %c0_i32, %c0_i32_0 : i32, i32
  }
  func.func @transform_3(%arg0: i32) -> (i32, i32) {
    %c0_i32 = arith.constant 0 : i32
    %c0_i32_0 = arith.constant 0 : i32
    %c0_i32_1 = arith.constant 0 : i32
    return %c0_i32, %c0_i32_0 : i32, i32
  }
  func.func @transform_4(%arg0: i32) -> (i32, i32) {
    %c0_i32 = arith.constant 0 : i32
    %c0_i32_0 = arith.constant 0 : i32
    %c0_i32_1 = arith.constant 0 : i32
    return %c0_i32, %c0_i32_0 : i32, i32
  }
  func.func @transform_5(%arg0: i32) -> (i32, i32) {
    %c0_i32 = arith.constant 0 : i32
    %c0_i32_0 = arith.constant 0 : i32
    %c0_i32_1 = arith.constant 0 : i32
    return %c0_i32, %c0_i32_0 : i32, i32
  }
  func.func @transform_6(%arg0: i32) -> (i32, i32) {
    %c0_i32 = arith.constant 0 : i32
    %c0_i32_0 = arith.constant 0 : i32
    %c0_i32_1 = arith.constant 0 : i32
    return %c0_i32, %c0_i32_0 : i32, i32
  }
  func.func @transform_7(%arg0: i32) -> (i32, i32) {
    %c0_i32 = arith.constant 0 : i32
    %c0_i32_0 = arith.constant 0 : i32
    %c0_i32_1 = arith.constant 0 : i32
    return %c0_i32, %c0_i32_0 : i32, i32
  }
  func.func @transform_8(%arg0: i32) -> (i32, i32) {
    %c0_i32 = arith.constant 0 : i32
    %c0_i32_0 = arith.constant 0 : i32
    %c0_i32_1 = arith.constant 0 : i32
    return %c0_i32, %c0_i32_0 : i32, i32
  }
  func.func @transform_9(%arg0: i32) -> (i32, i32) {
    %c0_i32 = arith.constant 0 : i32
    %c0_i32_0 = arith.constant 0 : i32
    %c0_i32_1 = arith.constant 0 : i32
    return %c0_i32, %c0_i32_0 : i32, i32
  }
  func.func @transform_10(%arg0: i32) -> (i32, i32) {
    %c0_i32 = arith.constant 0 : i32
    %c0_i32_0 = arith.constant 0 : i32
    %c0_i32_1 = arith.constant 0 : i32
    return %c0_i32, %c0_i32_0 : i32, i32
  }
  func.func @transform_11(%arg0: i32) -> (i32, i32) {
    %c0_i32 = arith.constant 0 : i32
    %c0_i32_0 = arith.constant 0 : i32
    %c0_i32_1 = arith.constant 0 : i32
    return %c0_i32, %c0_i32_0 : i32, i32
  }
  func.func @transform_12(%arg0: i32) -> (i32, i32) {
    %c0_i32 = arith.constant 0 : i32
    %c0_i32_0 = arith.constant 0 : i32
    %c0_i32_1 = arith.constant 0 : i32
    return %c0_i32, %c0_i32_0 : i32, i32
  }
  func.func @transform_13(%arg0: i32) -> (i32, i32) {
    %c0_i32 = arith.constant 0 : i32
    %c0_i32_0 = arith.constant 0 : i32
    %c0_i32_1 = arith.constant 0 : i32
    return %c0_i32, %c0_i32_0 : i32, i32
  }
  func.func @transform_14(%arg0: i32) -> (i32, i32) {
    %c0_i32 = arith.constant 0 : i32
    %c0_i32_0 = arith.constant 0 : i32
    %c0_i32_1 = arith.constant 0 : i32
    return %c0_i32, %c0_i32_0 : i32, i32
  }
  func.func @transform_15(%arg0: i32) -> (i32, i32) {
    %c0_i32 = arith.constant 0 : i32
    %c0_i32_0 = arith.constant 0 : i32
    %c0_i32_1 = arith.constant 0 : i32
    return %c0_i32, %c0_i32_0 : i32, i32
  }
}

</mosaic_0001>

<llo_original>
// kernel: transformer_sf_forward.1
$region0: #{transformer_sf_forward.1}
  #allocation0 [shape = 'u32[]', space=smem, size = 0x4, offset = 0x4, fixed_abs, tag = 'smem constant byte address 0x4 - core index']
  #allocation1 [shape = 'u32[144,128]{1,0:T(1,128)}', space=vmem, size = 0x12000, scoped, tag = 'internal scratch']
  %s0 = inlined_call_operand.vmem [shape: bf16[32,48], index: 0, kind: input, shape index: {}]
  %s1 = inlined_call_operand.vmem [shape: bf16[48,64], index: 1, kind: input, shape index: {}]
  %s2 = inlined_call_operand.vmem [shape: f32[1,64], index: 2, kind: input, shape index: {}]
  %s3 = inlined_call_operand.vmem [shape: bf16[64,64], index: 3, kind: input, shape index: {}]
  %s4 = inlined_call_operand.vmem [shape: f32[32,64], index: 4, kind: input, shape index: {}]
  %s5 = inlined_call_operand.vmem [shape: f32[8,64], index: 5, kind: input, shape index: {}]
  %s6 = inlined_call_operand.vmem [shape: bf16[64,64], index: 6, kind: input, shape index: {}]
  %s7 = inlined_call_operand.vmem [shape: bf16[64,128], index: 7, kind: input, shape index: {}]
  %s8 = inlined_call_operand.vmem [shape: bf16[64,64], index: 8, kind: input, shape index: {}]
  %s9 = inlined_call_operand.vmem [shape: bf16[64,128], index: 9, kind: input, shape index: {}]
  %s10 = inlined_call_operand.vmem [shape: f32[1,128], index: 10, kind: input, shape index: {}]
  %s11 = inlined_call_operand.vmem [shape: bf16[128,64], index: 11, kind: input, shape index: {}]
  %s12 = inlined_call_operand.vmem [shape: f32[1,64], index: 12, kind: input, shape index: {}]
  %s13 = inlined_call_operand.vmem [shape: bf16[64,384], index: 13, kind: input, shape index: {}]
  %s14 = inlined_call_operand.hbm [shape: f32[2,128], index: 14, kind: output, shape index: {0}]
  %s15 = inlined_call_operand.vmem [shape: f32[16,384], index: 15, kind: output, shape index: {1}]
  %16 = xla_tuple %s14, %s15
  %s17 = sld [smem:[#allocation0]]
  $region74: #{transformer_sf_forward.1} parent=0
    _
  %s19 = ssub.s32 1, %s17
  %s20 = scalar_select 0, %s19, %s17
  $region1: #{transformer_sf_forward.1} parent=0
    #allocation2 [shape = 'u8[1024]{0}', space=vmem, size = 0x400, scoped, tag = 'output window, operand 0, single buffered']
    #allocation3 [shape = 's32[1]{0}', space=sflag, size = 0x4, scoped, tag = 'scoped memory for transformer_sf_forward.1']
    %21 = vsyncpa [#allocation3], 0
    // Predicated region
    $region2: #{transformer_sf_forward.1} parent=1 // pred_check
      _
    $region3: #{transformer_sf_forward.1} parent=1 // pred_check_branch
      %23 = sbr.rel (0) target = $region5
    $region4: #{transformer_sf_forward.1} parent=1 // pred_region
      _
    $region5: #{transformer_sf_forward.1} parent=1 // pred_fallthru
      _
    // Predicated region
    $region6: #{transformer_sf_forward.1} parent=1 // pred_check
      _
    $region7: #{transformer_sf_forward.1} parent=1 // pred_check_branch
      %25 = sbr.rel (0) target = $region9
    $region8: #{transformer_sf_forward.1} parent=1 // pred_region
      _
    $region9: #{transformer_sf_forward.1} parent=1 // pred_fallthru
      _
    // Predicated region
    $region10: #{transformer_sf_forward.1} parent=1 // pred_check
      _
    $region11: #{transformer_sf_forward.1} parent=1 // pred_check_branch
      %27 = sbr.rel (0) target = $region13
    $region12: #{transformer_sf_forward.1} parent=1 // pred_region
      _
    $region13: #{transformer_sf_forward.1} parent=1 // pred_fallthru
      _
    // Predicated region
    $region14: #{transformer_sf_forward.1} parent=1 // pred_check
      _
    $region15: #{transformer_sf_forward.1} parent=1 // pred_check_branch
      %29 = sbr.rel (0) target = $region17
    $region16: #{transformer_sf_forward.1} parent=1 // pred_region
      _
    $region17: #{transformer_sf_forward.1} parent=1 // pred_fallthru
      _
    // Predicated region
    $region18: #{transformer_sf_forward.1} parent=1 // pred_check
      _
    $region19: #{transformer_sf_forward.1} parent=1 // pred_check_branch
      %31 = sbr.rel (0) target = $region21
    $region20: #{transformer_sf_forward.1} parent=1 // pred_region
      _
    $region21: #{transformer_sf_forward.1} parent=1 // pred_fallthru
      _
    // Predicated region
    $region22: #{transformer_sf_forward.1} parent=1 // pred_check
      _
    $region23: #{transformer_sf_forward.1} parent=1 // pred_check_branch
      %33 = sbr.rel (0) target = $region25
    $region24: #{transformer_sf_forward.1} parent=1 // pred_region
      _
    $region25: #{transformer_sf_forward.1} parent=1 // pred_fallthru
      _
    // Predicated region
    $region26: #{transformer_sf_forward.1} parent=1 // pred_check
      _
    $region27: #{transformer_sf_forward.1} parent=1 // pred_check_branch
      %35 = sbr.rel (0) target = $region29
    $region28: #{transformer_sf_forward.1} parent=1 // pred_region
      _
    $region29: #{transformer_sf_forward.1} parent=1 // pred_fallthru
      _
    // Predicated region
    $region30: #{transformer_sf_forward.1} parent=1 // pred_check
      _
    $region31: #{transformer_sf_forward.1} parent=1 // pred_check_branch
      %37 = sbr.rel (0) target = $region33
    $region32: #{transformer_sf_forward.1} parent=1 // pred_region
      _
    $region33: #{transformer_sf_forward.1} parent=1 // pred_fallthru
      _
    // Predicated region
    $region34: #{transformer_sf_forward.1} parent=1 // pred_check
      _
    $region35: #{transformer_sf_forward.1} parent=1 // pred_check_branch
      %39 = sbr.rel (0) target = $region37
    $region36: #{transformer_sf_forward.1} parent=1 // pred_region
      _
    $region37: #{transformer_sf_forward.1} parent=1 // pred_fallthru
      _
    // Predicated region
    $region38: #{transformer_sf_forward.1} parent=1 // pred_check
      _
    $region39: #{transformer_sf_forward.1} parent=1 // pred_check_branch
      %41 = sbr.rel (0) target = $region41
    $region40: #{transformer_sf_forward.1} parent=1 // pred_region
      _
    $region41: #{transformer_sf_forward.1} parent=1 // pred_fallthru
      _
    // Predicated region
    $region42: #{transformer_sf_forward.1} parent=1 // pred_check
      _
    $region43: #{transformer_sf_forward.1} parent=1 // pred_check_branch
      %43 = sbr.rel (0) target = $region45
    $region44: #{transformer_sf_forward.1} parent=1 // pred_region
      _
    $region45: #{transformer_sf_forward.1} parent=1 // pred_fallthru
      _
    // Predicated region
    $region46: #{transformer_sf_forward.1} parent=1 // pred_check
      _
    $region47: #{transformer_sf_forward.1} parent=1 // pred_check_branch
      %45 = sbr.rel (0) target = $region49
    $region48: #{transformer_sf_forward.1} parent=1 // pred_region
      _
    $region49: #{transformer_sf_forward.1} parent=1 // pred_fallthru
      _
    // Predicated region
    $region50: #{transformer_sf_forward.1} parent=1 // pred_check
      _
    $region51: #{transformer_sf_forward.1} parent=1 // pred_check_branch
      %47 = sbr.rel (0) target = $region53
    $region52: #{transformer_sf_forward.1} parent=1 // pred_region
      _
    $region53: #{transformer_sf_forward.1} parent=1 // pred_fallthru
      _
    // Predicated region
    $region54: #{transformer_sf_forward.1} parent=1 // pred_check
      _
    $region55: #{transformer_sf_forward.1} parent=1 // pred_check_branch
      %49 = sbr.rel (0) target = $region57
    $region56: #{transformer_sf_forward.1} parent=1 // pred_region
      _
    $region57: #{transformer_sf_forward.1} parent=1 // pred_fallthru
      _
    %v51 = vld [vmem:[%s0] sm:$0xf]
    %v52 = vld [vmem:[%s0 + $0x4] sm:$0xf]
    %v53 = vld [vmem:[%s0 + $0x8] sm:$0xf]
    %v54 = vld [vmem:[%s0 + $0xc] sm:$0xf]
    %v55 = vld [vmem:[%s1] sm:$0xf]
    %v56 = vld [vmem:[%s1 + $0x4] sm:$0xf]
    %v57 = vld [vmem:[%s1 + $0x8] sm:$0xf]
    %v58 = vld [vmem:[%s1 + $0xc] sm:$0xf]
    %v59 = vld [vmem:[%s1 + $0x10] sm:$0xf]
    %v60 = vld [vmem:[%s1 + $0x14] sm:$0xf]
    %v61 = vld [vmem:[%s2] sm:$0x1]
    %v63 = vlaneseq
    %v64 = vshrl.u32 %v63, 7
    %v65 = vsub.s32 0, %v64
    %v66 = vrot.slane %v61, %v65
    %v72 = vunpack.c.l.b16 %v51
    %v73 = vunpack.c.l.b16 %v52
    %v74 = vunpack.c.l.b16 %v53
    %v75 = vunpack.c.l.b16 %v54
    %v76 = vpack.c.b16 %v73, %v72
    %v77 = vpack.c.b16 %v75, %v74
    %v84 = vunpack.c.l.b16 %v55
    %v85 = vunpack.c.l.b16 %v56
    %v86 = vunpack.c.l.b16 %v57
    %v87 = vunpack.c.l.b16 %v58
    %v88 = vunpack.c.l.b16 %v59
    %v89 = vunpack.c.l.b16 %v60
    %v90 = vpack.c.b16 %v85, %v84
    %v91 = vpack.c.b16 %v87, %v86
    %v92 = vpack.c.b16 %v89, %v88
    %vm96 = vcmask 392192
    %v98 = vsel %vm96, %v76, 0
    %v101 = vsel %vm96, %v77, 0
    %103 = vmatprep.subr.bf16.mxu0 0
    %104 = vmatpush1.bf16.msra.mxu0 %v90
    %105 = vmatprep.subr.bf16.mxu0 0
    %106 = vmatpush1.bf16.msra.mxu0 %v91
    %107 = vmatprep.subr.bf16.mxu0 0
    %108 = vmatpush1.bf16.msra.mxu0 %v92
    %109 = vmatprep.subr.bf16.mxu0 0
    %110 = vmatpush1.bf16.msra.mxu0 0
    %111 = vmatprep.subr.bf16.mxu0 0
    %112 = vmatpush1.bf16.msra.mxu0 0
    %113 = vmatprep.subr.bf16.mxu0 0
    %114 = vmatpush1.bf16.msra.mxu0 0
    %115 = vmatprep.subr.bf16.mxu0 0
    %116 = vmatpush1.bf16.msra.mxu0 0
    %117 = vmatprep.subr.bf16.mxu0 0
    %118 = vmatpush1.bf16.msra.mxu0 0
    %119 = vmatprep.subr.bf16.mxu0 0
    %120 = vmatpush1.bf16.msra.mxu0 0
    %121 = vmatprep.subr.bf16.mxu0 0
    %122 = vmatpush1.bf16.msra.mxu0 0
    %123 = vmatprep.subr.bf16.mxu0 0
    %124 = vmatpush1.bf16.msra.mxu0 0
    %125 = vmatprep.subr.bf16.mxu0 0
    %126 = vmatpush1.bf16.msra.mxu0 0
    %127 = vmatprep.subr.bf16.mxu0 0
    %128 = vmatpush1.bf16.msra.mxu0 0
    %129 = vmatprep.subr.bf16.mxu0 0
    %130 = vmatpush1.bf16.msra.mxu0 0
    %131 = vmatprep.subr.bf16.mxu0 0
    %132 = vmatpush1.bf16.msra.mxu0 0
    %133 = vmatprep.subr.bf16.mxu0 0
    %134 = vmatpush1.bf16.msra.mxu0 0
    %135 = vmatprep.mubr.bf16.mxu0 0
    %136 = vmatmul.mubr.bf16.gmra.mrb[0].mxu0 %v98
    %v137 = vpop.f32.mrb[0].mxu0
    %v138 = vadd.f32 %v66, %v137
    %v139 = vpop.f32.mrb[0].mxu0
    %v140 = vpop.f32.mrb[0].mxu0
    %v141 = vadd.f32 %v66, %v140
    %v142 = vpop.f32.mrb[0].mxu0
    %143 = vmatprep.mubr.bf16.mxu0 0
    %144 = vmatmul.mubr.bf16.gmra.mrb[0].mxu0 %v101
    %v145 = vpop.f32.mrb[0].mxu0
    %v146 = vadd.f32 %v66, %v145
    %v147 = vpop.f32.mrb[0].mxu0
    %v148 = vpop.f32.mrb[0].mxu0
    %v149 = vadd.f32 %v66, %v148
    %v150 = vpop.f32.mrb[0].mxu0
    %151 = vdwg.mxu0
    %v152 = vmax.f32 %v138, 0.0
    %v153 = vmax.f32 %v141, 0.0
    %v154 = vmax.f32 %v146, 0.0
    %v155 = vmax.f32 %v149, 0.0
    %vm156 = vcmask 523264
    %v157 = vsel %vm156, %v152, 0.0
    %v158 = vsel %vm156, %v153, 0.0
    %v159 = vadd.f32 %v157, %v158
    %v160 = vrot.slane %v159, 4
    %v161 = vadd.f32 %v159, %v160
    %v162 = vrot.slane %v161, 2
    %v163 = vadd.f32 %v161, %v162
    %v164 = vrot.slane %v163, 1
    %v165 = vadd.f32 %v163, %v164
    %v166 = vrcp.pop 16.0
    %v167 = vmul.f32 %v165, %v166
    %v168 = vsel %vm156, %v154, 0.0
    %v169 = vsel %vm156, %v155, 0.0
    %v170 = vadd.f32 %v168, %v169
    %v171 = vrot.slane %v170, 4
    %v172 = vadd.f32 %v170, %v171
    %v173 = vrot.slane %v172, 2
    %v174 = vadd.f32 %v172, %v173
    %v175 = vrot.slane %v174, 1
    %v176 = vadd.f32 %v174, %v175
    %v177 = vmul.f32 %v176, %v166
    %vm178 = vcmask 1040384
    %v179 = vsel %vm178, %v167, %v177
    %v180 = vsel %vm156, %v179, 0.0
    %181 = vst [vmem:[#allocation2] sm:$0x3] %v180
    %v182 = vpack.c.bf16 %v153, %v152
    %v183 = vpack.c.bf16 %v155, %v154
    %v184 = vld [vmem:[%s3] sm:$0xf]
    %v185 = vld [vmem:[%s3 + $0x4] sm:$0xf]
    %v186 = vld [vmem:[%s3 + $0x8] sm:$0xf]
    %v187 = vld [vmem:[%s3 + $0xc] sm:$0xf]
    %v188 = vld [vmem:[%s3 + $0x10] sm:$0xf]
    %v189 = vld [vmem:[%s3 + $0x14] sm:$0xf]
    %v190 = vld [vmem:[%s3 + $0x18] sm:$0xf]
    %v191 = vld [vmem:[%s3 + $0x1c] sm:$0xf]
    %v192 = vld [vmem:[%s4] sm:$0xff]
    %v193 = vld [vmem:[%s4 + $0x8] sm:$0xff]
    %v194 = vld [vmem:[%s4 + $0x10] sm:$0xff]
    %v195 = vld [vmem:[%s4 + $0x18] sm:$0xff]
    %v204 = vunpack.c.l.b16 %v184
    %v205 = vunpack.c.l.b16 %v185
    %v206 = vunpack.c.l.b16 %v186
    %v207 = vunpack.c.l.b16 %v187
    %v208 = vunpack.c.l.b16 %v188
    %v209 = vunpack.c.l.b16 %v189
    %v210 = vunpack.c.l.b16 %v190
    %v211 = vunpack.c.l.b16 %v191
    %v212 = vpack.c.b16 %v205, %v204
    %v213 = vpack.c.b16 %v207, %v206
    %v214 = vpack.c.b16 %v209, %v208
    %v215 = vpack.c.b16 %v211, %v210
    %v221 = vsel %vm156, %v182, 0
    %v224 = vsel %vm156, %v183, 0
    %226 = vmatprep.subr.bf16.mxu0 0
    %227 = vmatpush1.bf16.msra.mxu0 %v212
    %228 = vmatprep.subr.bf16.mxu0 0
    %229 = vmatpush1.bf16.msra.mxu0 %v213
    %230 = vmatprep.subr.bf16.mxu0 0
    %231 = vmatpush1.bf16.msra.mxu0 %v214
    %232 = vmatprep.subr.bf16.mxu0 0
    %233 = vmatpush1.bf16.msra.mxu0 %v215
    %234 = vmatprep.subr.bf16.mxu0 0
    %235 = vmatpush1.bf16.msra.mxu0 0
    %236 = vmatprep.subr.bf16.mxu0 0
    %237 = vmatpush1.bf16.msra.mxu0 0
    %238 = vmatprep.subr.bf16.mxu0 0
    %239 = vmatpush1.bf16.msra.mxu0 0
    %240 = vmatprep.subr.bf16.mxu0 0
    %241 = vmatpush1.bf16.msra.mxu0 0
    %242 = vmatprep.subr.bf16.mxu0 0
    %243 = vmatpush1.bf16.msra.mxu0 0
    %244 = vmatprep.subr.bf16.mxu0 0
    %245 = vmatpush1.bf16.msra.mxu0 0
    %246 = vmatprep.subr.bf16.mxu0 0
    %247 = vmatpush1.bf16.msra.mxu0 0
    %248 = vmatprep.subr.bf16.mxu0 0
    %249 = vmatpush1.bf16.msra.mxu0 0
    %250 = vmatprep.subr.bf16.mxu0 0
    %251 = vmatpush1.bf16.msra.mxu0 0
    %252 = vmatprep.subr.bf16.mxu0 0
    %253 = vmatpush1.bf16.msra.mxu0 0
    %254 = vmatprep.subr.bf16.mxu0 0
    %255 = vmatpush1.bf16.msra.mxu0 0
    %256 = vmatprep.subr.bf16.mxu0 0
    %257 = vmatpush1.bf16.msra.mxu0 0
    %258 = vmatprep.mubr.bf16.mxu0 0
    %259 = vmatmul.mubr.bf16.gmra.mrb[0].mxu0 %v221
    %v260 = vpop.f32.mrb[0].mxu0
    %v261 = vadd.f32 %v192, %v260
    %v262 = vpop.f32.mrb[0].mxu0
    %v263 = vpop.f32.mrb[0].mxu0
    %v264 = vadd.f32 %v193, %v263
    %v265 = vpop.f32.mrb[0].mxu0
    %266 = vmatprep.mubr.bf16.mxu0 0
    %267 = vmatmul.mubr.bf16.gmra.mrb[0].mxu0 %v224
    %v268 = vpop.f32.mrb[0].mxu0
    %v269 = vadd.f32 %v194, %v268
    %v270 = vpop.f32.mrb[0].mxu0
    %v271 = vpop.f32.mrb[0].mxu0
    %v272 = vadd.f32 %v195, %v271
    %v273 = vpop.f32.mrb[0].mxu0
    %274 = vdwg.mxu0
    %v275 = vpack.c.bf16 %v264, %v261
    %v276 = vpack.c.bf16 %v272, %v269
    %v277 = vld [vmem:[%s7] sm:$0xf]
    %v278 = vld [vmem:[%s7 + $0x4] sm:$0xf]
    %v279 = vld [vmem:[%s7 + $0x8] sm:$0xf]
    %v280 = vld [vmem:[%s7 + $0xc] sm:$0xf]
    %v281 = vld [vmem:[%s7 + $0x10] sm:$0xf]
    %v282 = vld [vmem:[%s7 + $0x14] sm:$0xf]
    %v283 = vld [vmem:[%s7 + $0x18] sm:$0xf]
    %v284 = vld [vmem:[%s7 + $0x1c] sm:$0xf]
    %v293 = vunpack.c.l.b16 %v277
    %v294 = vunpack.c.l.b16 %v278
    %v295 = vunpack.c.l.b16 %v279
    %v296 = vunpack.c.l.b16 %v280
    %v297 = vunpack.c.l.b16 %v281
    %v298 = vunpack.c.l.b16 %v282
    %v299 = vunpack.c.l.b16 %v283
    %v300 = vunpack.c.l.b16 %v284
    %v301 = vpack.c.b16 %v294, %v293
    %v302 = vpack.c.b16 %v296, %v295
    %v303 = vpack.c.b16 %v298, %v297
    %v304 = vpack.c.b16 %v300, %v299
    %v310 = vsel %vm156, %v275, 0
    %v313 = vsel %vm156, %v276, 0
    %315 = vmatprep.subr.bf16.mxu0 0
    %316 = vmatpush1.bf16.msra.mxu0 %v301
    %317 = vmatprep.subr.bf16.mxu0 0
    %318 = vmatpush1.bf16.msra.mxu0 %v302
    %319 = vmatprep.subr.bf16.mxu0 0
    %320 = vmatpush1.bf16.msra.mxu0 %v303
    %321 = vmatprep.subr.bf16.mxu0 0
    %322 = vmatpush1.bf16.msra.mxu0 %v304
    %323 = vmatprep.subr.bf16.mxu0 0
    %324 = vmatpush1.bf16.msra.mxu0 0
    %325 = vmatprep.subr.bf16.mxu0 0
    %326 = vmatpush1.bf16.msra.mxu0 0
    %327 = vmatprep.subr.bf16.mxu0 0
    %328 = vmatpush1.bf16.msra.mxu0 0
    %329 = vmatprep.subr.bf16.mxu0 0
    %330 = vmatpush1.bf16.msra.mxu0 0
    %331 = vmatprep.subr.bf16.mxu0 0
    %332 = vmatpush1.bf16.msra.mxu0 0
    %333 = vmatprep.subr.bf16.mxu0 0
    %334 = vmatpush1.bf16.msra.mxu0 0
    %335 = vmatprep.subr.bf16.mxu0 0
    %336 = vmatpush1.bf16.msra.mxu0 0
    %337 = vmatprep.subr.bf16.mxu0 0
    %338 = vmatpush1.bf16.msra.mxu0 0
    %339 = vmatprep.subr.bf16.mxu0 0
    %340 = vmatpush1.bf16.msra.mxu0 0
    %341 = vmatprep.subr.bf16.mxu0 0
    %342 = vmatpush1.bf16.msra.mxu0 0
    %343 = vmatprep.subr.bf16.mxu0 0
    %344 = vmatpush1.bf16.msra.mxu0 0
    %345 = vmatprep.subr.bf16.mxu0 0
    %346 = vmatpush1.bf16.msra.mxu0 0
    %347 = vmatprep.mubr.bf16.mxu0 0
    %348 = vmatmul.mubr.bf16.gmra.mrb[0].mxu0 %v310
    %v349 = vpop.f32.mrb[0].mxu0
    %v350 = vadd.f32 0.0, %v349
    %v351 = vpop.f32.mrb[0].mxu0
    %v352 = vpop.f32.mrb[0].mxu0
    %v353 = vadd.f32 0.0, %v352
    %v354 = vpop.f32.mrb[0].mxu0
    %355 = vmatprep.mubr.bf16.mxu0 0
    %356 = vmatmul.mubr.bf16.gmra.mrb[0].mxu0 %v313
    %v357 = vpop.f32.mrb[0].mxu0
    %v358 = vadd.f32 0.0, %v357
    %v359 = vpop.f32.mrb[0].mxu0
    %v360 = vpop.f32.mrb[0].mxu0
    %v361 = vadd.f32 0.0, %v360
    %v362 = vpop.f32.mrb[0].mxu0
    %363 = vdwg.mxu0
    %v364 = vld [vmem:[%s5] sm:$0xff]
    %v365 = vpack.c.bf16 %v364, %v364
    %v366 = vld [vmem:[%s6] sm:$0xf]
    %v367 = vld [vmem:[%s6 + $0x4] sm:$0xf]
    %v368 = vld [vmem:[%s6 + $0x8] sm:$0xf]
    %v369 = vld [vmem:[%s6 + $0xc] sm:$0xf]
    %v370 = vld [vmem:[%s6 + $0x10] sm:$0xf]
    %v371 = vld [vmem:[%s6 + $0x14] sm:$0xf]
    %v372 = vld [vmem:[%s6 + $0x18] sm:$0xf]
    %v373 = vld [vmem:[%s6 + $0x1c] sm:$0xf]
    %v382 = vunpack.c.l.b16 %v366
    %v383 = vunpack.c.l.b16 %v367
    %v384 = vunpack.c.l.b16 %v368
    %v385 = vunpack.c.l.b16 %v369
    %v386 = vunpack.c.l.b16 %v370
    %v387 = vunpack.c.l.b16 %v371
    %v388 = vunpack.c.l.b16 %v372
    %v389 = vunpack.c.l.b16 %v373
    %v390 = vpack.c.b16 %v383, %v382
    %v391 = vpack.c.b16 %v385, %v384
    %v392 = vpack.c.b16 %v387, %v386
    %v393 = vpack.c.b16 %v389, %v388
    %v399 = vsel %vm156, %v365, 0
    %401 = vmatprep.subr.bf16.mxu0 0
    %402 = vmatpush1.bf16.msra.mxu0 %v390
    %403 = vmatprep.subr.bf16.mxu0 0
    %404 = vmatpush1.bf16.msra.mxu0 %v391
    %405 = vmatprep.subr.bf16.mxu0 0
    %406 = vmatpush1.bf16.msra.mxu0 %v392
    %407 = vmatprep.subr.bf16.mxu0 0
    %408 = vmatpush1.bf16.msra.mxu0 %v393
    %409 = vmatprep.subr.bf16.mxu0 0
    %410 = vmatpush1.bf16.msra.mxu0 0
    %411 = vmatprep.subr.bf16.mxu0 0
    %412 = vmatpush1.bf16.msra.mxu0 0
    %413 = vmatprep.subr.bf16.mxu0 0
    %414 = vmatpush1.bf16.msra.mxu0 0
    %415 = vmatprep.subr.bf16.mxu0 0
    %416 = vmatpush1.bf16.msra.mxu0 0
    %417 = vmatprep.subr.bf16.mxu0 0
    %418 = vmatpush1.bf16.msra.mxu0 0
    %419 = vmatprep.subr.bf16.mxu0 0
    %420 = vmatpush1.bf16.msra.mxu0 0
    %421 = vmatprep.subr.bf16.mxu0 0
    %422 = vmatpush1.bf16.msra.mxu0 0
    %423 = vmatprep.subr.bf16.mxu0 0
    %424 = vmatpush1.bf16.msra.mxu0 0
    %425 = vmatprep.subr.bf16.mxu0 0
    %426 = vmatpush1.bf16.msra.mxu0 0
    %427 = vmatprep.subr.bf16.mxu0 0
    %428 = vmatpush1.bf16.msra.mxu0 0
    %429 = vmatprep.subr.bf16.mxu0 0
    %430 = vmatpush1.bf16.msra.mxu0 0
    %431 = vmatprep.subr.bf16.mxu0 0
    %432 = vmatpush1.bf16.msra.mxu0 0
    %433 = vmatprep.mubr.bf16.mxu0 0
    %434 = vmatmul.mubr.bf16.gmra.mrb[0].mxu0 %v399
    %v435 = vpop.f32.mrb[0].mxu0
    %v436 = vadd.f32 0.0, %v435
    %v437 = vpop.f32.mrb[0].mxu0
    %v438 = vpop.f32.mrb[0].mxu0
    %v439 = vpop.f32.mrb[0].mxu0
    %440 = vdwg.mxu0
    %v441 = vpack.c.bf16 %v436, %v436
    %v442 = vpack.c.bf16 %v353, %v350
    %v444 = vsel %vm156, %v441, 0
    %v447 = vsel %vm156, %v442, 0
    %449 = vmatprep.subr.bf16.mxu0 0
    %450 = vmatpush1.bf16.xpose.msra.mxu0 %v447
    %451 = vmatprep.subr.bf16.mxu0 0
    %452 = vmatpush1.bf16.xpose.msra.mxu0 0
    %453 = vmatprep.subr.bf16.mxu0 0
    %454 = vmatpush1.bf16.xpose.msra.mxu0 0
    %455 = vmatprep.subr.bf16.mxu0 0
    %456 = vmatpush1.bf16.xpose.msra.mxu0 0
    %457 = vmatprep.subr.bf16.mxu0 0
    %458 = vmatpush1.bf16.xpose.msra.mxu0 0
    %459 = vmatprep.subr.bf16.mxu0 0
    %460 = vmatpush1.bf16.xpose.msra.mxu0 0
    %461 = vmatprep.subr.bf16.mxu0 0
    %462 = vmatpush1.bf16.xpose.msra.mxu0 0
    %463 = vmatprep.subr.bf16.mxu0 0
    %464 = vmatpush1.bf16.xpose.msra.mxu0 0
    %465 = vmatprep.subr.bf16.mxu0 0
    %466 = vmatpush1.bf16.xpose.msra.mxu0 0
    %467 = vmatprep.subr.bf16.mxu0 0
    %468 = vmatpush1.bf16.xpose.msra.mxu0 0
    %469 = vmatprep.subr.bf16.mxu0 0
    %470 = vmatpush1.bf16.xpose.msra.mxu0 0
    %471 = vmatprep.subr.bf16.mxu0 0
    %472 = vmatpush1.bf16.xpose.msra.mxu0 0
    %473 = vmatprep.subr.bf16.mxu0 0
    %474 = vmatpush1.bf16.xpose.msra.mxu0 0
    %475 = vmatprep.subr.bf16.mxu0 0
    %476 = vmatpush1.bf16.xpose.msra.mxu0 0
    %477 = vmatprep.subr.bf16.mxu0 0
    %478 = vmatpush1.bf16.xpose.msra.mxu0 0
    %479 = vmatprep.subr.bf16.mxu0 0
    %480 = vmatpush1.bf16.xpose.msra.mxu0 0
    %481 = vmatprep.mubr.bf16.mxu0 0
    %482 = vmatmul.mubr.bf16.gmra.mrb[0].mxu0 %v444
    %v483 = vpop.f32.mrb[0].mxu0
    %v484 = vadd.f32 0.0, %v483
    %v485 = vpop.f32.mrb[0].mxu0
    %v486 = vpop.f32.mrb[0].mxu0
    %v487 = vpop.f32.mrb[0].mxu0
    %488 = vdwg.mxu0
    %vm489 = vcmask 130048
    %v490 = vsel %vm489, %v484, -inf
    %491 = vmax.xlane.f32.xlu0 %v490
    %v492 = vpop.xlane.xlu0 %491
    %v493 = vsub.f32 %v484, %v492
    %v494 = vmul.f32 %v493, 1.442695
    %v495 = vpow.pop %v494
    %v496 = vsel %vm489, %v495, 0.0
    %497 = vadd.xlane.f32.xlu0 %v496
    %v498 = vpop.xlane.xlu0 %497
    %v499 = vrcp.pop %v498
    %v500 = vmul.f32 %v495, %v499
    %v501 = vpack.c.bf16 %v500, %v500
    %503 = vrot.lane.b32.xlu0 %v442, 64
    %v504 = vpop.permute.xlu0 %503
    %v507 = vsel %vm489, %v501, 0
    %509 = vmatprep.subr.bf16.mxu0 0
    %510 = vmatpush1.bf16.msra.mxu0 %v504
    %511 = vmatprep.subr.bf16.mxu0 0
    %512 = vmatpush1.bf16.msra.mxu0 0
    %513 = vmatprep.subr.bf16.mxu0 0
    %514 = vmatpush1.bf16.msra.mxu0 0
    %515 = vmatprep.subr.bf16.mxu0 0
    %516 = vmatpush1.bf16.msra.mxu0 0
    %517 = vmatprep.subr.bf16.mxu0 0
    %518 = vmatpush1.bf16.msra.mxu0 0
    %519 = vmatprep.subr.bf16.mxu0 0
    %520 = vmatpush1.bf16.msra.mxu0 0
    %521 = vmatprep.subr.bf16.mxu0 0
    %522 = vmatpush1.bf16.msra.mxu0 0
    %523 = vmatprep.subr.bf16.mxu0 0
    %524 = vmatpush1.bf16.msra.mxu0 0
    %525 = vmatprep.subr.bf16.mxu0 0
    %526 = vmatpush1.bf16.msra.mxu0 0
    %527 = vmatprep.subr.bf16.mxu0 0
    %528 = vmatpush1.bf16.msra.mxu0 0
    %529 = vmatprep.subr.bf16.mxu0 0
    %530 = vmatpush1.bf16.msra.mxu0 0
    %531 = vmatprep.subr.bf16.mxu0 0
    %532 = vmatpush1.bf16.msra.mxu0 0
    %533 = vmatprep.subr.bf16.mxu0 0
    %534 = vmatpush1.bf16.msra.mxu0 0
    %535 = vmatprep.subr.bf16.mxu0 0
    %536 = vmatpush1.bf16.msra.mxu0 0
    %537 = vmatprep.subr.bf16.mxu0 0
    %538 = vmatpush1.bf16.msra.mxu0 0
    %539 = vmatprep.subr.bf16.mxu0 0
    %540 = vmatpush1.bf16.msra.mxu0 0
    %541 = vmatprep.mubr.bf16.mxu0 0
    %542 = vmatmul.mubr.bf16.gmra.mrb[0].mxu0 %v507
    %v543 = vpop.f32.mrb[0].mxu0
    %v544 = vadd.f32 0.0, %v543
    %v545 = vpop.f32.mrb[0].mxu0
    %v546 = vpop.f32.mrb[0].mxu0
    %v547 = vpop.f32.mrb[0].mxu0
    %548 = vdwg.mxu0
    %v549 = vpack.c.bf16 %v361, %v358
    %v551 = vsel %vm156, %v549, 0
    %553 = vmatprep.subr.bf16.mxu0 0
    %554 = vmatpush1.bf16.xpose.msra.mxu0 %v551
    %555 = vmatprep.subr.bf16.mxu0 0
    %556 = vmatpush1.bf16.xpose.msra.mxu0 0
    %557 = vmatprep.subr.bf16.mxu0 0
    %558 = vmatpush1.bf16.xpose.msra.mxu0 0
    %559 = vmatprep.subr.bf16.mxu0 0
    %560 = vmatpush1.bf16.xpose.msra.mxu0 0
    %561 = vmatprep.subr.bf16.mxu0 0
    %562 = vmatpush1.bf16.xpose.msra.mxu0 0
    %563 = vmatprep.subr.bf16.mxu0 0
    %564 = vmatpush1.bf16.xpose.msra.mxu0 0
    %565 = vmatprep.subr.bf16.mxu0 0
    %566 = vmatpush1.bf16.xpose.msra.mxu0 0
    %567 = vmatprep.subr.bf16.mxu0 0
    %568 = vmatpush1.bf16.xpose.msra.mxu0 0
    %569 = vmatprep.subr.bf16.mxu0 0
    %570 = vmatpush1.bf16.xpose.msra.mxu0 0
    %571 = vmatprep.subr.bf16.mxu0 0
    %572 = vmatpush1.bf16.xpose.msra.mxu0 0
    %573 = vmatprep.subr.bf16.mxu0 0
    %574 = vmatpush1.bf16.xpose.msra.mxu0 0
    %575 = vmatprep.subr.bf16.mxu0 0
    %576 = vmatpush1.bf16.xpose.msra.mxu0 0
    %577 = vmatprep.subr.bf16.mxu0 0
    %578 = vmatpush1.bf16.xpose.msra.mxu0 0
    %579 = vmatprep.subr.bf16.mxu0 0
    %580 = vmatpush1.bf16.xpose.msra.mxu0 0
    %581 = vmatprep.subr.bf16.mxu0 0
    %582 = vmatpush1.bf16.xpose.msra.mxu0 0
    %583 = vmatprep.subr.bf16.mxu0 0
    %584 = vmatpush1.bf16.xpose.msra.mxu0 0
    %585 = vmatprep.mubr.bf16.mxu0 0
    %586 = vmatmul.mubr.bf16.gmra.mrb[0].mxu0 %v444
    %v587 = vpop.f32.mrb[0].mxu0
    %v588 = vadd.f32 0.0, %v587
    %v589 = vpop.f32.mrb[0].mxu0
    %v590 = vpop.f32.mrb[0].mxu0
    %v591 = vpop.f32.mrb[0].mxu0
    %592 = vdwg.mxu0
    %v593 = vsel %vm489, %v588, -inf
    %594 = vmax.xlane.f32.xlu0 %v593
    %v595 = vpop.xlane.xlu0 %594
    %v596 = vsub.f32 %v588, %v595
    %v597 = vmul.f32 %v596, 1.442695
    %v598 = vpow.pop %v597
    %v599 = vsel %vm489, %v598, 0.0
    %600 = vadd.xlane.f32.xlu0 %v599
    %v601 = vpop.xlane.xlu0 %600
    %v602 = vrcp.pop %v601
    %v603 = vmul.f32 %v598, %v602
    %v604 = vpack.c.bf16 %v603, %v603
    %606 = vrot.lane.b32.xlu0 %v549, 64
    %v607 = vpop.permute.xlu0 %606
    %v610 = vsel %vm489, %v604, 0
    %612 = vmatprep.subr.bf16.mxu0 0
    %613 = vmatpush1.bf16.msra.mxu0 %v607
    %614 = vmatprep.subr.bf16.mxu0 0
    %615 = vmatpush1.bf16.msra.mxu0 0
    %616 = vmatprep.subr.bf16.mxu0 0
    %617 = vmatpush1.bf16.msra.mxu0 0
    %618 = vmatprep.subr.bf16.mxu0 0
    %619 = vmatpush1.bf16.msra.mxu0 0
    %620 = vmatprep.subr.bf16.mxu0 0
    %621 = vmatpush1.bf16.msra.mxu0 0
    %622 = vmatprep.subr.bf16.mxu0 0
    %623 = vmatpush1.bf16.msra.mxu0 0
    %624 = vmatprep.subr.bf16.mxu0 0
    %625 = vmatpush1.bf16.msra.mxu0 0
    %626 = vmatprep.subr.bf16.mxu0 0
    %627 = vmatpush1.bf16.msra.mxu0 0
    %628 = vmatprep.subr.bf16.mxu0 0
    %629 = vmatpush1.bf16.msra.mxu0 0
    %630 = vmatprep.subr.bf16.mxu0 0
    %631 = vmatpush1.bf16.msra.mxu0 0
    %632 = vmatprep.subr.bf16.mxu0 0
    %633 = vmatpush1.bf16.msra.mxu0 0
    %634 = vmatprep.subr.bf16.mxu0 0
    %635 = vmatpush1.bf16.msra.mxu0 0
    %636 = vmatprep.subr.bf16.mxu0 0
    %637 = vmatpush1.bf16.msra.mxu0 0
    %638 = vmatprep.subr.bf16.mxu0 0
    %639 = vmatpush1.bf16.msra.mxu0 0
    %640 = vmatprep.subr.bf16.mxu0 0
    %641 = vmatpush1.bf16.msra.mxu0 0
    %642 = vmatprep.subr.bf16.mxu0 0
    %643 = vmatpush1.bf16.msra.mxu0 0
    %644 = vmatprep.mubr.bf16.mxu0 0
    %645 = vmatmul.mubr.bf16.gmra.mrb[0].mxu0 %v610
    %v646 = vpop.f32.mrb[0].mxu0
    %v647 = vadd.f32 0.0, %v646
    %v648 = vpop.f32.mrb[0].mxu0
    %v649 = vpop.f32.mrb[0].mxu0
    %v650 = vpop.f32.mrb[0].mxu0
    %651 = vdwg.mxu0
    %v652 = vpack.c.bf16 %v647, %v544
    %v653 = vld [vmem:[%s8] sm:$0xf]
    %v654 = vld [vmem:[%s8 + $0x4] sm:$0xf]
    %v655 = vld [vmem:[%s8 + $0x8] sm:$0xf]
    %v656 = vld [vmem:[%s8 + $0xc] sm:$0xf]
    %v657 = vld [vmem:[%s8 + $0x10] sm:$0xf]
    %v658 = vld [vmem:[%s8 + $0x14] sm:$0xf]
    %v659 = vld [vmem:[%s8 + $0x18] sm:$0xf]
    %v660 = vld [vmem:[%s8 + $0x1c] sm:$0xf]
    %v669 = vunpack.c.l.b16 %v653
    %v670 = vunpack.c.l.b16 %v654
    %v671 = vunpack.c.l.b16 %v655
    %v672 = vunpack.c.l.b16 %v656
    %v673 = vunpack.c.l.b16 %v657
    %v674 = vunpack.c.l.b16 %v658
    %v675 = vunpack.c.l.b16 %v659
    %v676 = vunpack.c.l.b16 %v660
    %v677 = vpack.c.b16 %v670, %v669
    %v678 = vpack.c.b16 %v672, %v671
    %v679 = vpack.c.b16 %v674, %v673
    %v680 = vpack.c.b16 %v676, %v675
    %v686 = vsel %vm156, %v652, 0
    %688 = vmatprep.subr.bf16.mxu0 0
    %689 = vmatpush1.bf16.msra.mxu0 %v677
    %690 = vmatprep.subr.bf16.mxu0 0
    %691 = vmatpush1.bf16.msra.mxu0 %v678
    %692 = vmatprep.subr.bf16.mxu0 0
    %693 = vmatpush1.bf16.msra.mxu0 %v679
    %694 = vmatprep.subr.bf16.mxu0 0
    %695 = vmatpush1.bf16.msra.mxu0 %v680
    %696 = vmatprep.subr.bf16.mxu0 0
    %697 = vmatpush1.bf16.msra.mxu0 0
    %698 = vmatprep.subr.bf16.mxu0 0
    %699 = vmatpush1.bf16.msra.mxu0 0
    %700 = vmatprep.subr.bf16.mxu0 0
    %701 = vmatpush1.bf16.msra.mxu0 0
    %702 = vmatprep.subr.bf16.mxu0 0
    %703 = vmatpush1.bf16.msra.mxu0 0
    %704 = vmatprep.subr.bf16.mxu0 0
    %705 = vmatpush1.bf16.msra.mxu0 0
    %706 = vmatprep.subr.bf16.mxu0 0
    %707 = vmatpush1.bf16.msra.mxu0 0
    %708 = vmatprep.subr.bf16.mxu0 0
    %709 = vmatpush1.bf16.msra.mxu0 0
    %710 = vmatprep.subr.bf16.mxu0 0
    %711 = vmatpush1.bf16.msra.mxu0 0
    %712 = vmatprep.subr.bf16.mxu0 0
    %713 = vmatpush1.bf16.msra.mxu0 0
    %714 = vmatprep.subr.bf16.mxu0 0
    %715 = vmatpush1.bf16.msra.mxu0 0
    %716 = vmatprep.subr.bf16.mxu0 0
    %717 = vmatpush1.bf16.msra.mxu0 0
    %718 = vmatprep.subr.bf16.mxu0 0
    %719 = vmatpush1.bf16.msra.mxu0 0
    %720 = vmatprep.mubr.bf16.mxu0 0
    %721 = vmatmul.mubr.bf16.gmra.mrb[0].mxu0 %v686
    %v722 = vpop.f32.mrb[0].mxu0
    %v723 = vadd.f32 0.0, %v722
    %v724 = vpop.f32.mrb[0].mxu0
    %v725 = vpop.f32.mrb[0].mxu0
    %v726 = vadd.f32 0.0, %v725
    %v727 = vpop.f32.mrb[0].mxu0
    %728 = vdwg.mxu0
    %v729 = vadd.f32 %v364, %v723
    %v730 = vadd.f32 %v364, %v726
    %v731 = vpack.c.bf16 %v730, %v729
    %v732 = vld [vmem:[%s9] sm:$0xf]
    %v733 = vld [vmem:[%s9 + $0x4] sm:$0xf]
    %v734 = vld [vmem:[%s9 + $0x8] sm:$0xf]
    %v735 = vld [vmem:[%s9 + $0xc] sm:$0xf]
    %v736 = vld [vmem:[%s9 + $0x10] sm:$0xf]
    %v737 = vld [vmem:[%s9 + $0x14] sm:$0xf]
    %v738 = vld [vmem:[%s9 + $0x18] sm:$0xf]
    %v739 = vld [vmem:[%s9 + $0x1c] sm:$0xf]
    %v740 = vld [vmem:[%s10] sm:$0x1]
    %v742 = vlaneseq
    %v743 = vshrl.u32 %v742, 7
    %v744 = vsub.s32 0, %v743
    %v745 = vrot.slane %v740, %v744
    %v755 = vunpack.c.l.b16 %v732
    %v756 = vunpack.c.l.b16 %v733
    %v757 = vunpack.c.l.b16 %v734
    %v758 = vunpack.c.l.b16 %v735
    %v759 = vunpack.c.l.b16 %v736
    %v760 = vunpack.c.l.b16 %v737
    %v761 = vunpack.c.l.b16 %v738
    %v762 = vunpack.c.l.b16 %v739
    %v763 = vpack.c.b16 %v756, %v755
    %v764 = vpack.c.b16 %v758, %v757
    %v765 = vpack.c.b16 %v760, %v759
    %v766 = vpack.c.b16 %v762, %v761
    %v772 = vsel %vm156, %v731, 0
    %774 = vmatprep.subr.bf16.mxu0 0
    %775 = vmatpush1.bf16.msra.mxu0 %v763
    %776 = vmatprep.subr.bf16.mxu0 0
    %777 = vmatpush1.bf16.msra.mxu0 %v764
    %778 = vmatprep.subr.bf16.mxu0 0
    %779 = vmatpush1.bf16.msra.mxu0 %v765
    %780 = vmatprep.subr.bf16.mxu0 0
    %781 = vmatpush1.bf16.msra.mxu0 %v766
    %782 = vmatprep.subr.bf16.mxu0 0
    %783 = vmatpush1.bf16.msra.mxu0 0
    %784 = vmatprep.subr.bf16.mxu0 0
    %785 = vmatpush1.bf16.msra.mxu0 0
    %786 = vmatprep.subr.bf16.mxu0 0
    %787 = vmatpush1.bf16.msra.mxu0 0
    %788 = vmatprep.subr.bf16.mxu0 0
    %789 = vmatpush1.bf16.msra.mxu0 0
    %790 = vmatprep.subr.bf16.mxu0 0
    %791 = vmatpush1.bf16.msra.mxu0 0
    %792 = vmatprep.subr.bf16.mxu0 0
    %793 = vmatpush1.bf16.msra.mxu0 0
    %794 = vmatprep.subr.bf16.mxu0 0
    %795 = vmatpush1.bf16.msra.mxu0 0
    %796 = vmatprep.subr.bf16.mxu0 0
    %797 = vmatpush1.bf16.msra.mxu0 0
    %798 = vmatprep.subr.bf16.mxu0 0
    %799 = vmatpush1.bf16.msra.mxu0 0
    %800 = vmatprep.subr.bf16.mxu0 0
    %801 = vmatpush1.bf16.msra.mxu0 0
    %802 = vmatprep.subr.bf16.mxu0 0
    %803 = vmatpush1.bf16.msra.mxu0 0
    %804 = vmatprep.subr.bf16.mxu0 0
    %805 = vmatpush1.bf16.msra.mxu0 0
    %806 = vmatprep.mubr.bf16.mxu0 0
    %807 = vmatmul.mubr.bf16.gmra.mrb[0].mxu0 %v772
    %v808 = vpop.f32.mrb[0].mxu0
    %v809 = vadd.f32 %v745, %v808
    %v810 = vpop.f32.mrb[0].mxu0
    %v811 = vpop.f32.mrb[0].mxu0
    %v812 = vadd.f32 %v745, %v811
    %v813 = vpop.f32.mrb[0].mxu0
    %814 = vdwg.mxu0
    %v815 = vmax.f32 %v809, 0.0
    %v816 = vmax.f32 %v812, 0.0
    %v817 = vpack.c.bf16 %v816, %v815
    %v818 = vld [vmem:[%s11] sm:$0xf]
    %v819 = vld [vmem:[%s11 + $0x4] sm:$0xf]
    %v820 = vld [vmem:[%s11 + $0x8] sm:$0xf]
    %v821 = vld [vmem:[%s11 + $0xc] sm:$0xf]
    %v822 = vld [vmem:[%s11 + $0x10] sm:$0xf]
    %v823 = vld [vmem:[%s11 + $0x14] sm:$0xf]
    %v824 = vld [vmem:[%s11 + $0x18] sm:$0xf]
    %v825 = vld [vmem:[%s11 + $0x1c] sm:$0xf]
    %v826 = vld [vmem:[%s11 + $0x20] sm:$0xf]
    %v827 = vld [vmem:[%s11 + $0x24] sm:$0xf]
    %v828 = vld [vmem:[%s11 + $0x28] sm:$0xf]
    %v829 = vld [vmem:[%s11 + $0x2c] sm:$0xf]
    %v830 = vld [vmem:[%s11 + $0x30] sm:$0xf]
    %v831 = vld [vmem:[%s11 + $0x34] sm:$0xf]
    %v832 = vld [vmem:[%s11 + $0x38] sm:$0xf]
    %v833 = vld [vmem:[%s11 + $0x3c] sm:$0xf]
    %v834 = vld [vmem:[%s12] sm:$0x1]
    %v836 = vlaneseq
    %v837 = vshrl.u32 %v836, 7
    %v838 = vsub.s32 0, %v837
    %v839 = vrot.slane %v834, %v838
    %v857 = vunpack.c.l.b16 %v818
    %v858 = vunpack.c.l.b16 %v819
    %v859 = vunpack.c.l.b16 %v820
    %v860 = vunpack.c.l.b16 %v821
    %v861 = vunpack.c.l.b16 %v822
    %v862 = vunpack.c.l.b16 %v823
    %v863 = vunpack.c.l.b16 %v824
    %v864 = vunpack.c.l.b16 %v825
    %v865 = vunpack.c.l.b16 %v826
    %v866 = vunpack.c.l.b16 %v827
    %v867 = vunpack.c.l.b16 %v828
    %v868 = vunpack.c.l.b16 %v829
    %v869 = vunpack.c.l.b16 %v830
    %v870 = vunpack.c.l.b16 %v831
    %v871 = vunpack.c.l.b16 %v832
    %v872 = vunpack.c.l.b16 %v833
    %v873 = vpack.c.b16 %v858, %v857
    %v874 = vpack.c.b16 %v860, %v859
    %v875 = vpack.c.b16 %v862, %v861
    %v876 = vpack.c.b16 %v864, %v863
    %v877 = vpack.c.b16 %v866, %v865
    %v878 = vpack.c.b16 %v868, %v867
    %v879 = vpack.c.b16 %v870, %v869
    %v880 = vpack.c.b16 %v872, %v871
    %889 = vmatprep.subr.bf16.mxu0 0
    %890 = vmatpush1.bf16.msra.mxu0 %v873
    %891 = vmatprep.subr.bf16.mxu0 0
    %892 = vmatpush1.bf16.msra.mxu0 %v874
    %893 = vmatprep.subr.bf16.mxu0 0
    %894 = vmatpush1.bf16.msra.mxu0 %v875
    %895 = vmatprep.subr.bf16.mxu0 0
    %896 = vmatpush1.bf16.msra.mxu0 %v876
    %897 = vmatprep.subr.bf16.mxu0 0
    %898 = vmatpush1.bf16.msra.mxu0 %v877
    %899 = vmatprep.subr.bf16.mxu0 0
    %900 = vmatpush1.bf16.msra.mxu0 %v878
    %901 = vmatprep.subr.bf16.mxu0 0
    %902 = vmatpush1.bf16.msra.mxu0 %v879
    %903 = vmatprep.subr.bf16.mxu0 0
    %904 = vmatpush1.bf16.msra.mxu0 %v880
    %905 = vmatprep.subr.bf16.mxu0 0
    %906 = vmatpush1.bf16.msra.mxu0 0
    %907 = vmatprep.subr.bf16.mxu0 0
    %908 = vmatpush1.bf16.msra.mxu0 0
    %909 = vmatprep.subr.bf16.mxu0 0
    %910 = vmatpush1.bf16.msra.mxu0 0
    %911 = vmatprep.subr.bf16.mxu0 0
    %912 = vmatpush1.bf16.msra.mxu0 0
    %913 = vmatprep.subr.bf16.mxu0 0
    %914 = vmatpush1.bf16.msra.mxu0 0
    %915 = vmatprep.subr.bf16.mxu0 0
    %916 = vmatpush1.bf16.msra.mxu0 0
    %917 = vmatprep.subr.bf16.mxu0 0
    %918 = vmatpush1.bf16.msra.mxu0 0
    %919 = vmatprep.subr.bf16.mxu0 0
    %920 = vmatpush1.bf16.msra.mxu0 0
    %921 = vmatprep.mubr.bf16.mxu0 0
    %922 = vmatmul.mubr.bf16.gmra.mrb[0].mxu0 %v817
    %v923 = vpop.f32.mrb[0].mxu0
    %v924 = vadd.f32 %v839, %v923
    %v925 = vpop.f32.mrb[0].mxu0
    %v926 = vpop.f32.mrb[0].mxu0
    %v927 = vadd.f32 %v839, %v926
    %v928 = vpop.f32.mrb[0].mxu0
    %929 = vdwg.mxu0
    %v930 = vadd.f32 %v729, %v924
    %v931 = vadd.f32 %v730, %v927
    %v932 = vpack.c.bf16 %v931, %v930
    %v933 = vld [vmem:[%s13] sm:$0xff]
    %v934 = vld [vmem:[%s13 + $0x8] sm:$0xf]
    %v935 = vld [vmem:[%s13 + $0xc] sm:$0xff]
    %v936 = vld [vmem:[%s13 + $0x14] sm:$0xf]
    %v937 = vld [vmem:[%s13 + $0x18] sm:$0xff]
    %v938 = vld [vmem:[%s13 + $0x20] sm:$0xf]
    %v939 = vld [vmem:[%s13 + $0x24] sm:$0xff]
    %v940 = vld [vmem:[%s13 + $0x2c] sm:$0xf]
    %v941 = vld [vmem:[%s13 + $0x30] sm:$0xff]
    %v942 = vld [vmem:[%s13 + $0x38] sm:$0xf]
    %v943 = vld [vmem:[%s13 + $0x3c] sm:$0xff]
    %v944 = vld [vmem:[%s13 + $0x44] sm:$0xf]
    %v945 = vld [vmem:[%s13 + $0x48] sm:$0xff]
    %v946 = vld [vmem:[%s13 + $0x50] sm:$0xf]
    %v947 = vld [vmem:[%s13 + $0x54] sm:$0xff]
    %v948 = vld [vmem:[%s13 + $0x5c] sm:$0xf]
    %v965 = vunpack.c.l.b16 %v933
    %v966 = vunpack.c.h.b16 %v933
    %v967 = vunpack.c.l.b16 %v934
    %v968 = vunpack.c.l.b16 %v935
    %v969 = vunpack.c.h.b16 %v935
    %v970 = vunpack.c.l.b16 %v936
    %v971 = vunpack.c.l.b16 %v937
    %v972 = vunpack.c.h.b16 %v937
    %v973 = vunpack.c.l.b16 %v938
    %v974 = vunpack.c.l.b16 %v939
    %v975 = vunpack.c.h.b16 %v939
    %v976 = vunpack.c.l.b16 %v940
    %v977 = vunpack.c.l.b16 %v941
    %v978 = vunpack.c.h.b16 %v941
    %v979 = vunpack.c.l.b16 %v942
    %v980 = vunpack.c.l.b16 %v943
    %v981 = vunpack.c.h.b16 %v943
    %v982 = vunpack.c.l.b16 %v944
    %v983 = vunpack.c.l.b16 %v945
    %v984 = vunpack.c.h.b16 %v945
    %v985 = vunpack.c.l.b16 %v946
    %v986 = vunpack.c.l.b16 %v947
    %v987 = vunpack.c.h.b16 %v947
    %v988 = vunpack.c.l.b16 %v948
    %v989 = vpack.c.b16 %v968, %v965
    %v990 = vpack.c.b16 %v969, %v966
    %v991 = vpack.c.b16 %v970, %v967
    %v992 = vpack.c.b16 %v974, %v971
    %v993 = vpack.c.b16 %v975, %v972
    %v994 = vpack.c.b16 %v976, %v973
    %v995 = vpack.c.b16 %v980, %v977
    %v996 = vpack.c.b16 %v981, %v978
    %v997 = vpack.c.b16 %v982, %v979
    %v998 = vpack.c.b16 %v986, %v983
    %v999 = vpack.c.b16 %v987, %v984
    %v1000 = vpack.c.b16 %v988, %v985
    %v1014 = vsel %vm156, %v932, 0
    %1016 = vmatprep.subr.bf16.mxu0 %v990
    %1017 = vmatpush1.bf16.msra.mxu0 %v989
    %1018 = vmatprep.subr.bf16.mxu0 %v993
    %1019 = vmatpush1.bf16.msra.mxu0 %v992
    %1020 = vmatprep.subr.bf16.mxu0 %v996
    %1021 = vmatpush1.bf16.msra.mxu0 %v995
    %1022 = vmatprep.subr.bf16.mxu0 %v999
    %1023 = vmatpush1.bf16.msra.mxu0 %v998
    %1024 = vmatprep.subr.bf16.mxu0 0
    %1025 = vmatpush1.bf16.msra.mxu0 0
    %1026 = vmatprep.subr.bf16.mxu0 0
    %1027 = vmatpush1.bf16.msra.mxu0 0
    %1028 = vmatprep.subr.bf16.mxu0 0
    %1029 = vmatpush1.bf16.msra.mxu0 0
    %1030 = vmatprep.subr.bf16.mxu0 0
    %1031 = vmatpush1.bf16.msra.mxu0 0
    %1032 = vmatprep.subr.bf16.mxu0 0
    %1033 = vmatpush1.bf16.msra.mxu0 0
    %1034 = vmatprep.subr.bf16.mxu0 0
    %1035 = vmatpush1.bf16.msra.mxu0 0
    %1036 = vmatprep.subr.bf16.mxu0 0
    %1037 = vmatpush1.bf16.msra.mxu0 0
    %1038 = vmatprep.subr.bf16.mxu0 0
    %1039 = vmatpush1.bf16.msra.mxu0 0
    %1040 = vmatprep.subr.bf16.mxu0 0
    %1041 = vmatpush1.bf16.msra.mxu0 0
    %1042 = vmatprep.subr.bf16.mxu0 0
    %1043 = vmatpush1.bf16.msra.mxu0 0
    %1044 = vmatprep.subr.bf16.mxu0 0
    %1045 = vmatpush1.bf16.msra.mxu0 0
    %1046 = vmatprep.subr.bf16.mxu0 0
    %1047 = vmatpush1.bf16.msra.mxu0 0
    %1048 = vmatprep.mubr.bf16.mxu0 0
    %1049 = vmatmul.mubr.bf16.gmra.mrb[0].mxu0 %v1014
    %v1050 = vpop.f32.mrb[0].mxu0
    %v1051 = vadd.f32 0.0, %v1050
    %v1052 = vpop.f32.mrb[0].mxu0
    %v1053 = vadd.f32 0.0, %v1052
    %v1054 = vpop.f32.mrb[0].mxu0
    %v1055 = vadd.f32 0.0, %v1054
    %v1056 = vpop.f32.mrb[0].mxu0
    %v1057 = vadd.f32 0.0, %v1056
    %1058 = vdwg.mxu0
    %1059 = vmatprep.subr.bf16.mxu0 0
    %1060 = vmatpush1.bf16.msra.mxu0 %v991
    %1061 = vmatprep.subr.bf16.mxu0 0
    %1062 = vmatpush1.bf16.msra.mxu0 %v994
    %1063 = vmatprep.subr.bf16.mxu0 0
    %1064 = vmatpush1.bf16.msra.mxu0 %v997
    %1065 = vmatprep.subr.bf16.mxu0 0
    %1066 = vmatpush1.bf16.msra.mxu0 %v1000
    %1067 = vmatprep.subr.bf16.mxu0 0
    %1068 = vmatpush1.bf16.msra.mxu0 0
    %1069 = vmatprep.subr.bf16.mxu0 0
    %1070 = vmatpush1.bf16.msra.mxu0 0
    %1071 = vmatprep.subr.bf16.mxu0 0
    %1072 = vmatpush1.bf16.msra.mxu0 0
    %1073 = vmatprep.subr.bf16.mxu0 0
    %1074 = vmatpush1.bf16.msra.mxu0 0
    %1075 = vmatprep.subr.bf16.mxu0 0
    %1076 = vmatpush1.bf16.msra.mxu0 0
    %1077 = vmatprep.subr.bf16.mxu0 0
    %1078 = vmatpush1.bf16.msra.mxu0 0
    %1079 = vmatprep.subr.bf16.mxu0 0
    %1080 = vmatpush1.bf16.msra.mxu0 0
    %1081 = vmatprep.subr.bf16.mxu0 0
    %1082 = vmatpush1.bf16.msra.mxu0 0
    %1083 = vmatprep.subr.bf16.mxu0 0
    %1084 = vmatpush1.bf16.msra.mxu0 0
    %1085 = vmatprep.subr.bf16.mxu0 0
    %1086 = vmatpush1.bf16.msra.mxu0 0
    %1087 = vmatprep.subr.bf16.mxu0 0
    %1088 = vmatpush1.bf16.msra.mxu0 0
    %1089 = vmatprep.subr.bf16.mxu0 0
    %1090 = vmatpush1.bf16.msra.mxu0 0
    %1091 = vmatprep.mubr.bf16.mxu0 0
    %1092 = vmatmul.mubr.bf16.gmra.mrb[0].mxu0 %v1014
    %v1093 = vpop.f32.mrb[0].mxu0
    %v1094 = vadd.f32 0.0, %v1093
    %v1095 = vpop.f32.mrb[0].mxu0
    %v1096 = vpop.f32.mrb[0].mxu0
    %v1097 = vadd.f32 0.0, %v1096
    %v1098 = vpop.f32.mrb[0].mxu0
    %1099 = vdwg.mxu0
    %1100 = vst [vmem:[%s15] sm:$0xff] %v1051
    %1101 = vst [vmem:[%s15 + $0x8] sm:$0xff] %v1053
    %1102 = vst [vmem:[%s15 + $0x10] sm:$0xff] %v1094
    %1103 = vst [vmem:[%s15 + $0x18] sm:$0xff] %v1055
    %1104 = vst [vmem:[%s15 + $0x20] sm:$0xff] %v1057
    %1105 = vst [vmem:[%s15 + $0x28] sm:$0xff] %v1097
    // Predicated region
    $region58: #{transformer_sf_forward.1} parent=1 // pred_check
      _
    $region59: #{transformer_sf_forward.1} parent=1 // pred_check_branch
      %1107 = sbr.rel (0) target = $region61
    $region60: #{transformer_sf_forward.1} parent=1 // pred_region
      %s1109 = ssub.s32 32, 32
      %1110 = vsyncadd [#allocation3], %s1109
      %s1112 = sshll.u32 [#allocation2], 4
      %s1113 = int_to_ptr.vmem [resolvable:$true] %s1112
      %1115 = dma.vmem_to_hbm [thread:$0]  %s1113, 32, %s14, [#allocation3]
    $region61: #{transformer_sf_forward.1} parent=1 // pred_fallthru
      _
    // Predicated region
    $region62: #{transformer_sf_forward.1} parent=1 // pred_check
      _
    $region63: #{transformer_sf_forward.1} parent=1 // pred_check_branch
      %1117 = sbr.rel (0) target = $region65
    $region64: #{transformer_sf_forward.1} parent=1 // pred_region
      _
    $region65: #{transformer_sf_forward.1} parent=1 // pred_fallthru
      _
    // Predicated region
    $region66: #{transformer_sf_forward.1} parent=1 // pred_check
      _
    $region67: #{transformer_sf_forward.1} parent=1 // pred_check_branch
      %1119 = sbr.rel (0) target = $region69
    $region68: #{transformer_sf_forward.1} parent=1 // pred_region
      %1120 = dma.done [#allocation3], 32
    $region69: #{transformer_sf_forward.1} parent=1 // pred_fallthru
      _
    // Predicated region
    $region70: #{transformer_sf_forward.1} parent=1 // pred_check
      _
    $region71: #{transformer_sf_forward.1} parent=1 // pred_check_branch
      %1122 = sbr.rel (0) target = $region73
    $region72: #{transformer_sf_forward.1} parent=1 // pred_region
      _
    $region73: #{transformer_sf_forward.1} parent=1 // pred_fallthru
      _
    %1123 = vsyncpa [#allocation3], 1

</llo_original>
